<compile_context>
chip_gen: v7x
topology: tpu7x:2x2x1
jax: 0.10.0
libtpu: 0.0.40
codegen_flags: <defaults>
</compile_context>

<pallas_src>
import jax
import jax.numpy as jnp
from jax import lax
from jax.experimental import pallas as pl
from jax.experimental.pallas import tpu as pltpu


def _round_up(a, b):
    return (a + b - 1) // b * b


def _make_lstm_kernel(time_block, Hp, mm_dtype):
    """time_block: steps per grid block (multiple of 8). Hp: per-gate padded width."""
    chunks = time_block // 8

    def kernel(x_ref, w_ref, u_ref, b_ref, out_ref, h_scr, s_scr, xu_scr):
        # Initialize the carried (h, s) state on the first time block only.
        @pl.when(pl.program_id(0) == 0)
        def _():
            h_scr[...] = jnp.zeros_like(h_scr)
            s_scr[...] = jnp.zeros_like(s_scr)

        # Per-block input projection + bias: one batched MXU matmul per block,
        # parked in VMEM scratch (not held live in vregs across the recurrence).
        xu_scr[...] = (
            jnp.dot(x_ref[...], u_ref[...], preferred_element_type=jnp.float32)
            + b_ref[...]
        )

        def chunk_body(c, carry):
            h, s = carry
            base = pl.multiple_of(c * 8, 8)
            xu_chunk = xu_scr[pl.ds(base, 8), :]            # (8, 4Hp) f32, aligned load
            rows = []
            for i in range(8):                              # static 8-step unroll
                pre = xu_chunk[i:i + 1, :]                  # (1, 4Hp)
                # Fused recurrent pre-activation: one matmul per step; W stays in
                # VMEM (read at point of use, never forced resident in vregs).
                z = jnp.dot(h.astype(mm_dtype), w_ref[...],
                            preferred_element_type=jnp.float32) + pre
                # One fused sigmoid over all four gates, via tanh (EUP slot).
                zs = 0.5 * jnp.tanh(0.5 * z) + 0.5          # (1, 4Hp)
                f = zs[:, 0 * Hp:1 * Hp]                    # forget
                cg = zs[:, 1 * Hp:2 * Hp]                   # candidate (sigmoid, per spec)
                g = zs[:, 2 * Hp:3 * Hp]                    # input gate
                q = zs[:, 3 * Hp:4 * Hp]                    # output gate
                s = f * s + g * cg
                h = jnp.tanh(s) * q
                rows.append(h)
            # One lane- and sublane-dense (8, Hp) store per chunk.
            out_ref[pl.ds(base, 8), :] = jnp.concatenate(rows, axis=0)
            return (h, s)

        h, s = lax.fori_loop(0, chunks, chunk_body, (h_scr[...], s_scr[...]))
        h_scr[...] = h
        s_scr[...] = s

    return kernel


def lstm_forward(x, params, *, matmul_dtype=jnp.float32, time_block=256):
    """x: (seq_len, embed_dim). params: PyTorch-convention LSTM parameters
    (U* are (H, E), W* are (H, H), B* are (H,)). Returns (seq_len, H) f32."""
    x = jnp.asarray(x, jnp.float32)
    S, E = x.shape
    H = params["Bf"].shape[0]
    Hp = _round_up(H, 128)          # per-gate lane-padded width
    H4p = 4 * Hp
    pad_h = Hp - H
    mm_dtype = jnp.dtype(matmul_dtype)

    def gate_w(name):               # (H, H) -> (Hp, Hp), pre-transposed, zero-padded
        w = jnp.asarray(params[name], jnp.float32).T
        return jnp.pad(w, ((0, pad_h), (0, pad_h)))

    def gate_u(name):               # (H, E) -> (E, Hp)
        u = jnp.asarray(params[name], jnp.float32).T
        return jnp.pad(u, ((0, 0), (0, pad_h)))

    def gate_b(name):               # (H,) -> (1, Hp)
        b = jnp.asarray(params[name], jnp.float32).reshape(1, H)
        return jnp.pad(b, ((0, 0), (0, pad_h)))

    # Fused gate order along lanes: [f | c | g | q], each gate in its own
    # 128-aligned Hp-lane slab. Padded rows of W_all are zero, so padded h lanes
    # never feed back into real lanes.
    w_all = jnp.concatenate([gate_w("Wf"), gate_w("W"), gate_w("Wg"), gate_w("Wq")], axis=1)
    u_all = jnp.concatenate([gate_u("Uf"), gate_u("U"), gate_u("Ug"), gate_u("Uq")], axis=1)
    b_all = jnp.concatenate([gate_b("Bf"), gate_b("B"), gate_b("Bg"), gate_b("Bq")], axis=1)

    # Matmul operands in mm_dtype (bf16 = MXU-native path); bias / state stay f32.
    w_all = w_all.astype(mm_dtype)
    u_all = u_all.astype(mm_dtype)
    x_mm = x.astype(mm_dtype)

    # Time blocking: block is a multiple of 8 (aligned chunked stores); pad the
    # sequence up to a multiple of the block. Padded steps run after all real
    # steps, so they cannot perturb real outputs, and are sliced off below.
    TB = _round_up(min(time_block, _round_up(S, 8)), 8)
    Sp = _round_up(S, TB)
    if Sp != S:
        x_mm = jnp.pad(x_mm, ((0, Sp - S), (0, 0)))

    kernel = _make_lstm_kernel(TB, Hp, mm_dtype)

    out = pl.pallas_call(
        kernel,
        out_shape=jax.ShapeDtypeStruct((Sp, Hp), jnp.float32),
        grid=(Sp // TB,),
        in_specs=[
            pl.BlockSpec((TB, E), lambda t: (t, 0)),      # x: streamed per time block
            pl.BlockSpec((Hp, H4p), lambda t: (0, 0)),    # W_all: same block -> stays resident
            pl.BlockSpec((E, H4p), lambda t: (0, 0)),     # U_all
            pl.BlockSpec((1, H4p), lambda t: (0, 0)),     # B_all
        ],
        out_specs=pl.BlockSpec((TB, Hp), lambda t: (t, 0)),
        scratch_shapes=[
            pltpu.VMEM((1, Hp), jnp.float32),             # h carry (persists across grid)
            pltpu.VMEM((1, Hp), jnp.float32),             # s carry
            pltpu.VMEM((TB, H4p), jnp.float32),           # per-block input projection
        ],
        compiler_params=pltpu.CompilerParams(
            dimension_semantics=("arbitrary",)),          # time axis is sequential
    )(x_mm, w_all, u_all, b_all)

    return out[:S, :H]


def _reference_lstm(x, params):
    """Pure-JAX reference matching the PyTorch forward exactly."""
    H = params["Bf"].shape[0]

    def step(carry, xt):
        h, s = carry
        f = jax.nn.sigmoid(params["Wf"] @ h + params["Uf"] @ xt + params["Bf"])
        c = jax.nn.sigmoid(params["W"] @ h + params["U"] @ xt + params["B"])
        g = jax.nn.sigmoid(params["Wg"] @ h + params["Ug"] @ xt + params["Bg"])
        s = f * s + g * c
        q = jax.nn.sigmoid(params["Wq"] @ h + params["Uq"] @ xt + params["Bq"])
        h = jnp.tanh(s) * q
        return (h, s), h

    (_, _), outs = lax.scan(step, (jnp.zeros(H), jnp.zeros(H)), x)
    return outs


if __name__ == "__main__":
    seq_len, embed_dim, hidden_dim = 8, 16, 32

    key = jax.random.PRNGKey(0)
    keys = jax.random.split(key, 13)

    # torch.rand -> uniform[0,1); deterministic synthetic init
    params = {
        "Uf": jax.random.uniform(keys[0], (hidden_dim, embed_dim), jnp.float32),
        "Wf": jax.random.uniform(keys[1], (hidden_dim, hidden_dim), jnp.float32),
        "Bf": jax.random.uniform(keys[2], (hidden_dim,), jnp.float32),
        "Ug": jax.random.uniform(keys[3], (hidden_dim, embed_dim), jnp.float32),
        "Wg": jax.random.uniform(keys[4], (hidden_dim, hidden_dim), jnp.float32),
        "Bg": jax.random.uniform(keys[5], (hidden_dim,), jnp.float32),
        "Uq": jax.random.uniform(keys[6], (hidden_dim, embed_dim), jnp.float32),
        "Wq": jax.random.uniform(keys[7], (hidden_dim, hidden_dim), jnp.float32),
        "Bq": jax.random.uniform(keys[8], (hidden_dim,), jnp.float32),
        "U":  jax.random.uniform(keys[9], (hidden_dim, embed_dim), jnp.float32),
        "W":  jax.random.uniform(keys[10], (hidden_dim, hidden_dim), jnp.float32),
        "B":  jax.random.uniform(keys[11], (hidden_dim,), jnp.float32),
    }
    x = jax.random.uniform(keys[12], (seq_len, embed_dim), jnp.float32)

    ref = jax.block_until_ready(_reference_lstm(x, params))

    # f32-operand path: exact match against the reference.
    out = jax.block_until_ready(lstm_forward(x, params))
    assert out.shape == (seq_len, hidden_dim)
    assert jnp.allclose(out, ref, atol=1e-5, rtol=1e-5), float(jnp.max(jnp.abs(out - ref)))

    # bf16-operand (MXU-native) path: gate/state math stays f32; looser tolerance.
    out_bf16 = jax.block_until_ready(
        lstm_forward(x, params, matmul_dtype=jnp.bfloat16))
    assert out_bf16.shape == (seq_len, hidden_dim)
    assert jnp.allclose(out_bf16, ref, atol=3e-2, rtol=3e-2)

    print("KERNEL_OK")
</pallas_src>

<mosaic_0001>
module attributes {stable_mosaic.version = 11 : i64} {
  func.func @kernel(%arg0: i32, %arg1: memref<8x16xf32, #tpu.memory_space<vmem>>, %arg2: memref<128x512xf32, #tpu.memory_space<vmem>>, %arg3: memref<16x512xf32, #tpu.memory_space<vmem>>, %arg4: memref<1x512xf32, #tpu.memory_space<vmem>>, %arg5: memref<8x128xf32, #tpu.memory_space<vmem>>, %arg6: memref<1x128xf32, #tpu.memory_space<vmem>>, %arg7: memref<1x128xf32, #tpu.memory_space<vmem>>, %arg8: memref<8x512xf32, #tpu.memory_space<vmem>>) attributes {dimension_semantics = [#tpu.dimension_semantics<arbitrary>], iteration_bounds = array<i64: 1>, scalar_prefetch = 0 : i64, scratch_operands = 3 : i64, tpu.core_type = #tpu.core_type<tc>, window_params = [{transform_indices = @transform_0, window_bounds = array<i64: 8, 16>}, {pipeline_mode = #tpu.pipeline_mode<synchronous>, transform_indices = @transform_1, window_bounds = array<i64: 128, 512>}, {pipeline_mode = #tpu.pipeline_mode<synchronous>, transform_indices = @transform_2, window_bounds = array<i64: 16, 512>}, {pipeline_mode = #tpu.pipeline_mode<synchronous>, transform_indices = @transform_3, window_bounds = array<i64: 1, 512>}, {transform_indices = @transform_4, window_bounds = array<i64: 8, 128>}]} {
    %c0_i32 = arith.constant 0 : i32
    %0 = arith.cmpi eq, %arg0, %c0_i32 : i32
    %1 = arith.extui %0 : i1 to i32
    %c0_i32_0 = arith.constant 0 : i32
    %2 = arith.cmpi ne, %1, %c0_i32_0 : i32
    scf.if %2 {
      %cst_67 = arith.constant 0.000000e+00 : f32
      %181 = vector.broadcast %cst_67 : f32 to vector<1x128xf32>
      %c0_68 = arith.constant 0 : index
      %c0_69 = arith.constant 0 : index
      %182 = vector.load %arg6[%c0_68, %c0_69] : memref<1x128xf32, #tpu.memory_space<vmem>>, vector<1x128xf32>
      tpu.vector_store %arg6[%c0_68, %c0_69], %181 {strides = array<i32>} : memref<1x128xf32, #tpu.memory_space<vmem>>, vector<1x128xf32>,
      %cst_70 = arith.constant 0.000000e+00 : f32
      %183 = vector.broadcast %cst_70 : f32 to vector<1x128xf32>
      %c0_71 = arith.constant 0 : index
      %c0_72 = arith.constant 0 : index
      %184 = vector.load %arg7[%c0_71, %c0_72] : memref<1x128xf32, #tpu.memory_space<vmem>>, vector<1x128xf32>
      tpu.vector_store %arg7[%c0_71, %c0_72], %183 {strides = array<i32>} : memref<1x128xf32, #tpu.memory_space<vmem>>, vector<1x128xf32>,
    } else {
    }
    %c0 = arith.constant 0 : index
    %c0_1 = arith.constant 0 : index
    %3 = vector.load %arg1[%c0, %c0_1] : memref<8x16xf32, #tpu.memory_space<vmem>>, vector<8x16xf32>
    %c0_2 = arith.constant 0 : index
    %c0_3 = arith.constant 0 : index
    %4 = vector.load %arg3[%c0_2, %c0_3] : memref<16x512xf32, #tpu.memory_space<vmem>>, vector<16x512xf32>
    %cst = arith.constant dense<0.000000e+00> : vector<8x512xf32>
    %5 = tpu.matmul %3, %4, %cst {dimension_numbers = #tpu.dot_dimension_numbers<[1], [0], [0], [1], [0, 0, 1, 1], [], []>} : vector<8x16xf32>, vector<16x512xf32>, vector<8x512xf32> -> vector<8x512xf32>
    %c0_4 = arith.constant 0 : index
    %c0_5 = arith.constant 0 : index
    %6 = vector.load %arg4[%c0_4, %c0_5] : memref<1x512xf32, #tpu.memory_space<vmem>>, vector<1x512xf32>
    %7 = vector.broadcast %6 : vector<1x512xf32> to vector<8x512xf32>
    %8 = arith.addf %5, %7 : vector<8x512xf32>
    %c0_6 = arith.constant 0 : index
    %c0_7 = arith.constant 0 : index
    %9 = vector.load %arg8[%c0_6, %c0_7] : memref<8x512xf32, #tpu.memory_space<vmem>>, vector<8x512xf32>
    tpu.vector_store %arg8[%c0_6, %c0_7], %8 {strides = array<i32>} : memref<8x512xf32, #tpu.memory_space<vmem>>, vector<8x512xf32>,
    %c0_8 = arith.constant 0 : index
    %c0_9 = arith.constant 0 : index
    %10 = vector.load %arg6[%c0_8, %c0_9] : memref<1x128xf32, #tpu.memory_space<vmem>>, vector<1x128xf32>
    %c0_10 = arith.constant 0 : index
    %c0_11 = arith.constant 0 : index
    %11 = vector.load %arg7[%c0_10, %c0_11] : memref<1x128xf32, #tpu.memory_space<vmem>>, vector<1x128xf32>
    %c0_i32_12 = arith.constant 0 : i32
    %c8_i32 = arith.constant 8 : i32
    %12 = arith.muli %c0_i32_12, %c8_i32 : i32
    %13 = tpu.assume_multiple %12, 8 : i32
    %14 = arith.index_cast %13 : i32 to index
    %c0_13 = arith.constant 0 : index
    %15 = vector.load %arg8[%14, %c0_13] : memref<8x512xf32, #tpu.memory_space<vmem>>, vector<8x512xf32>
    %16 = vector.extract_strided_slice %15 {offsets = [0, 0], sizes = [1, 512], strides = [1, 1]} : vector<8x512xf32> to vector<1x512xf32>
    %c0_14 = arith.constant 0 : index
    %c0_15 = arith.constant 0 : index
    %17 = vector.load %arg2[%c0_14, %c0_15] : memref<128x512xf32, #tpu.memory_space<vmem>>, vector<128x512xf32>
    %cst_16 = arith.constant dense<0.000000e+00> : vector<1x512xf32>
    %18 = tpu.matmul %10, %17, %cst_16 {dimension_numbers = #tpu.dot_dimension_numbers<[1], [0], [0], [1], [0, 0, 1, 1], [], []>} : vector<1x128xf32>, vector<128x512xf32>, vector<1x512xf32> -> vector<1x512xf32>
    %19 = arith.addf %18, %16 : vector<1x512xf32>
    %cst_17 = arith.constant 5.000000e-01 : f32
    %20 = vector.broadcast %cst_17 : f32 to vector<1x512xf32>
    %21 = arith.mulf %20, %19 : vector<1x512xf32>
    %22 = math.tanh %21 : vector<1x512xf32>
    %cst_18 = arith.constant 5.000000e-01 : f32
    %23 = vector.broadcast %cst_18 : f32 to vector<1x512xf32>
    %24 = arith.mulf %23, %22 : vector<1x512xf32>
    %cst_19 = arith.constant 5.000000e-01 : f32
    %25 = vector.broadcast %cst_19 : f32 to vector<1x512xf32>
    %26 = arith.addf %24, %25 : vector<1x512xf32>
    %27 = vector.extract_strided_slice %26 {offsets = [0, 0], sizes = [1, 128], strides = [1, 1]} : vector<1x512xf32> to vector<1x128xf32>
    %28 = vector.extract_strided_slice %26 {offsets = [0, 128], sizes = [1, 128], strides = [1, 1]} : vector<1x512xf32> to vector<1x128xf32>
    %29 = vector.extract_strided_slice %26 {offsets = [0, 256], sizes = [1, 128], strides = [1, 1]} : vector<1x512xf32> to vector<1x128xf32>
    %30 = vector.extract_strided_slice %26 {offsets = [0, 384], sizes = [1, 128], strides = [1, 1]} : vector<1x512xf32> to vector<1x128xf32>
    %31 = arith.mulf %27, %11 : vector<1x128xf32>
    %32 = arith.mulf %29, %28 : vector<1x128xf32>
    %33 = arith.addf %31, %32 : vector<1x128xf32>
    %34 = math.tanh %33 : vector<1x128xf32>
    %35 = arith.mulf %34, %30 : vector<1x128xf32>
    %36 = vector.extract_strided_slice %15 {offsets = [1, 0], sizes = [1, 512], strides = [1, 1]} : vector<8x512xf32> to vector<1x512xf32>
    %c0_20 = arith.constant 0 : index
    %c0_21 = arith.constant 0 : index
    %37 = vector.load %arg2[%c0_20, %c0_21] : memref<128x512xf32, #tpu.memory_space<vmem>>, vector<128x512xf32>
    %cst_22 = arith.constant dense<0.000000e+00> : vector<1x512xf32>
    %38 = tpu.matmul %35, %37, %cst_22 {dimension_numbers = #tpu.dot_dimension_numbers<[1], [0], [0], [1], [0, 0, 1, 1], [], []>} : vector<1x128xf32>, vector<128x512xf32>, vector<1x512xf32> -> vector<1x512xf32>
    %39 = arith.addf %38, %36 : vector<1x512xf32>
    %cst_23 = arith.constant 5.000000e-01 : f32
    %40 = vector.broadcast %cst_23 : f32 to vector<1x512xf32>
    %41 = arith.mulf %40, %39 : vector<1x512xf32>
    %42 = math.tanh %41 : vector<1x512xf32>
    %cst_24 = arith.constant 5.000000e-01 : f32
    %43 = vector.broadcast %cst_24 : f32 to vector<1x512xf32>
    %44 = arith.mulf %43, %42 : vector<1x512xf32>
    %cst_25 = arith.constant 5.000000e-01 : f32
    %45 = vector.broadcast %cst_25 : f32 to vector<1x512xf32>
    %46 = arith.addf %44, %45 : vector<1x512xf32>
    %47 = vector.extract_strided_slice %46 {offsets = [0, 0], sizes = [1, 128], strides = [1, 1]} : vector<1x512xf32> to vector<1x128xf32>
    %48 = vector.extract_strided_slice %46 {offsets = [0, 128], sizes = [1, 128], strides = [1, 1]} : vector<1x512xf32> to vector<1x128xf32>
    %49 = vector.extract_strided_slice %46 {offsets = [0, 256], sizes = [1, 128], strides = [1, 1]} : vector<1x512xf32> to vector<1x128xf32>
    %50 = vector.extract_strided_slice %46 {offsets = [0, 384], sizes = [1, 128], strides = [1, 1]} : vector<1x512xf32> to vector<1x128xf32>
    %51 = arith.mulf %47, %33 : vector<1x128xf32>
    %52 = arith.mulf %49, %48 : vector<1x128xf32>
    %53 = arith.addf %51, %52 : vector<1x128xf32>
    %54 = math.tanh %53 : vector<1x128xf32>
    %55 = arith.mulf %54, %50 : vector<1x128xf32>
    %56 = vector.extract_strided_slice %15 {offsets = [2, 0], sizes = [1, 512], strides = [1, 1]} : vector<8x512xf32> to vector<1x512xf32>
    %c0_26 = arith.constant 0 : index
    %c0_27 = arith.constant 0 : index
    %57 = vector.load %arg2[%c0_26, %c0_27] : memref<128x512xf32, #tpu.memory_space<vmem>>, vector<128x512xf32>
    %cst_28 = arith.constant dense<0.000000e+00> : vector<1x512xf32>
    %58 = tpu.matmul %55, %57, %cst_28 {dimension_numbers = #tpu.dot_dimension_numbers<[1], [0], [0], [1], [0, 0, 1, 1], [], []>} : vector<1x128xf32>, vector<128x512xf32>, vector<1x512xf32> -> vector<1x512xf32>
    %59 = arith.addf %58, %56 : vector<1x512xf32>
    %cst_29 = arith.constant 5.000000e-01 : f32
    %60 = vector.broadcast %cst_29 : f32 to vector<1x512xf32>
    %61 = arith.mulf %60, %59 : vector<1x512xf32>
    %62 = math.tanh %61 : vector<1x512xf32>
    %cst_30 = arith.constant 5.000000e-01 : f32
    %63 = vector.broadcast %cst_30 : f32 to vector<1x512xf32>
    %64 = arith.mulf %63, %62 : vector<1x512xf32>
    %cst_31 = arith.constant 5.000000e-01 : f32
    %65 = vector.broadcast %cst_31 : f32 to vector<1x512xf32>
    %66 = arith.addf %64, %65 : vector<1x512xf32>
    %67 = vector.extract_strided_slice %66 {offsets = [0, 0], sizes = [1, 128], strides = [1, 1]} : vector<1x512xf32> to vector<1x128xf32>
    %68 = vector.extract_strided_slice %66 {offsets = [0, 128], sizes = [1, 128], strides = [1, 1]} : vector<1x512xf32> to vector<1x128xf32>
    %69 = vector.extract_strided_slice %66 {offsets = [0, 256], sizes = [1, 128], strides = [1, 1]} : vector<1x512xf32> to vector<1x128xf32>
    %70 = vector.extract_strided_slice %66 {offsets = [0, 384], sizes = [1, 128], strides = [1, 1]} : vector<1x512xf32> to vector<1x128xf32>
    %71 = arith.mulf %67, %53 : vector<1x128xf32>
    %72 = arith.mulf %69, %68 : vector<1x128xf32>
    %73 = arith.addf %71, %72 : vector<1x128xf32>
    %74 = math.tanh %73 : vector<1x128xf32>
    %75 = arith.mulf %74, %70 : vector<1x128xf32>
    %76 = vector.extract_strided_slice %15 {offsets = [3, 0], sizes = [1, 512], strides = [1, 1]} : vector<8x512xf32> to vector<1x512xf32>
    %c0_32 = arith.constant 0 : index
    %c0_33 = arith.constant 0 : index
    %77 = vector.load %arg2[%c0_32, %c0_33] : memref<128x512xf32, #tpu.memory_space<vmem>>, vector<128x512xf32>
    %cst_34 = arith.constant dense<0.000000e+00> : vector<1x512xf32>
    %78 = tpu.matmul %75, %77, %cst_34 {dimension_numbers = #tpu.dot_dimension_numbers<[1], [0], [0], [1], [0, 0, 1, 1], [], []>} : vector<1x128xf32>, vector<128x512xf32>, vector<1x512xf32> -> vector<1x512xf32>
    %79 = arith.addf %78, %76 : vector<1x512xf32>
    %cst_35 = arith.constant 5.000000e-01 : f32
    %80 = vector.broadcast %cst_35 : f32 to vector<1x512xf32>
    %81 = arith.mulf %80, %79 : vector<1x512xf32>
    %82 = math.tanh %81 : vector<1x512xf32>
    %cst_36 = arith.constant 5.000000e-01 : f32
    %83 = vector.broadcast %cst_36 : f32 to vector<1x512xf32>
    %84 = arith.mulf %83, %82 : vector<1x512xf32>
    %cst_37 = arith.constant 5.000000e-01 : f32
    %85 = vector.broadcast %cst_37 : f32 to vector<1x512xf32>
    %86 = arith.addf %84, %85 : vector<1x512xf32>
    %87 = vector.extract_strided_slice %86 {offsets = [0, 0], sizes = [1, 128], strides = [1, 1]} : vector<1x512xf32> to vector<1x128xf32>
    %88 = vector.extract_strided_slice %86 {offsets = [0, 128], sizes = [1, 128], strides = [1, 1]} : vector<1x512xf32> to vector<1x128xf32>
    %89 = vector.extract_strided_slice %86 {offsets = [0, 256], sizes = [1, 128], strides = [1, 1]} : vector<1x512xf32> to vector<1x128xf32>
    %90 = vector.extract_strided_slice %86 {offsets = [0, 384], sizes = [1, 128], strides = [1, 1]} : vector<1x512xf32> to vector<1x128xf32>
    %91 = arith.mulf %87, %73 : vector<1x128xf32>
    %92 = arith.mulf %89, %88 : vector<1x128xf32>
    %93 = arith.addf %91, %92 : vector<1x128xf32>
    %94 = math.tanh %93 : vector<1x128xf32>
    %95 = arith.mulf %94, %90 : vector<1x128xf32>
    %96 = vector.extract_strided_slice %15 {offsets = [4, 0], sizes = [1, 512], strides = [1, 1]} : vector<8x512xf32> to vector<1x512xf32>
    %c0_38 = arith.constant 0 : index
    %c0_39 = arith.constant 0 : index
    %97 = vector.load %arg2[%c0_38, %c0_39] : memref<128x512xf32, #tpu.memory_space<vmem>>, vector<128x512xf32>
    %cst_40 = arith.constant dense<0.000000e+00> : vector<1x512xf32>
    %98 = tpu.matmul %95, %97, %cst_40 {dimension_numbers = #tpu.dot_dimension_numbers<[1], [0], [0], [1], [0, 0, 1, 1], [], []>} : vector<1x128xf32>, vector<128x512xf32>, vector<1x512xf32> -> vector<1x512xf32>
    %99 = arith.addf %98, %96 : vector<1x512xf32>
    %cst_41 = arith.constant 5.000000e-01 : f32
    %100 = vector.broadcast %cst_41 : f32 to vector<1x512xf32>
    %101 = arith.mulf %100, %99 : vector<1x512xf32>
    %102 = math.tanh %101 : vector<1x512xf32>
    %cst_42 = arith.constant 5.000000e-01 : f32
    %103 = vector.broadcast %cst_42 : f32 to vector<1x512xf32>
    %104 = arith.mulf %103, %102 : vector<1x512xf32>
    %cst_43 = arith.constant 5.000000e-01 : f32
    %105 = vector.broadcast %cst_43 : f32 to vector<1x512xf32>
    %106 = arith.addf %104, %105 : vector<1x512xf32>
    %107 = vector.extract_strided_slice %106 {offsets = [0, 0], sizes = [1, 128], strides = [1, 1]} : vector<1x512xf32> to vector<1x128xf32>
    %108 = vector.extract_strided_slice %106 {offsets = [0, 128], sizes = [1, 128], strides = [1, 1]} : vector<1x512xf32> to vector<1x128xf32>
    %109 = vector.extract_strided_slice %106 {offsets = [0, 256], sizes = [1, 128], strides = [1, 1]} : vector<1x512xf32> to vector<1x128xf32>
    %110 = vector.extract_strided_slice %106 {offsets = [0, 384], sizes = [1, 128], strides = [1, 1]} : vector<1x512xf32> to vector<1x128xf32>
    %111 = arith.mulf %107, %93 : vector<1x128xf32>
    %112 = arith.mulf %109, %108 : vector<1x128xf32>
    %113 = arith.addf %111, %112 : vector<1x128xf32>
    %114 = math.tanh %113 : vector<1x128xf32>
    %115 = arith.mulf %114, %110 : vector<1x128xf32>
    %116 = vector.extract_strided_slice %15 {offsets = [5, 0], sizes = [1, 512], strides = [1, 1]} : vector<8x512xf32> to vector<1x512xf32>
    %c0_44 = arith.constant 0 : index
    %c0_45 = arith.constant 0 : index
    %117 = vector.load %arg2[%c0_44, %c0_45] : memref<128x512xf32, #tpu.memory_space<vmem>>, vector<128x512xf32>
    %cst_46 = arith.constant dense<0.000000e+00> : vector<1x512xf32>
    %118 = tpu.matmul %115, %117, %cst_46 {dimension_numbers = #tpu.dot_dimension_numbers<[1], [0], [0], [1], [0, 0, 1, 1], [], []>} : vector<1x128xf32>, vector<128x512xf32>, vector<1x512xf32> -> vector<1x512xf32>
    %119 = arith.addf %118, %116 : vector<1x512xf32>
    %cst_47 = arith.constant 5.000000e-01 : f32
    %120 = vector.broadcast %cst_47 : f32 to vector<1x512xf32>
    %121 = arith.mulf %120, %119 : vector<1x512xf32>
    %122 = math.tanh %121 : vector<1x512xf32>
    %cst_48 = arith.constant 5.000000e-01 : f32
    %123 = vector.broadcast %cst_48 : f32 to vector<1x512xf32>
    %124 = arith.mulf %123, %122 : vector<1x512xf32>
    %cst_49 = arith.constant 5.000000e-01 : f32
    %125 = vector.broadcast %cst_49 : f32 to vector<1x512xf32>
    %126 = arith.addf %124, %125 : vector<1x512xf32>
    %127 = vector.extract_strided_slice %126 {offsets = [0, 0], sizes = [1, 128], strides = [1, 1]} : vector<1x512xf32> to vector<1x128xf32>
    %128 = vector.extract_strided_slice %126 {offsets = [0, 128], sizes = [1, 128], strides = [1, 1]} : vector<1x512xf32> to vector<1x128xf32>
    %129 = vector.extract_strided_slice %126 {offsets = [0, 256], sizes = [1, 128], strides = [1, 1]} : vector<1x512xf32> to vector<1x128xf32>
    %130 = vector.extract_strided_slice %126 {offsets = [0, 384], sizes = [1, 128], strides = [1, 1]} : vector<1x512xf32> to vector<1x128xf32>
    %131 = arith.mulf %127, %113 : vector<1x128xf32>
    %132 = arith.mulf %129, %128 : vector<1x128xf32>
    %133 = arith.addf %131, %132 : vector<1x128xf32>
    %134 = math.tanh %133 : vector<1x128xf32>
    %135 = arith.mulf %134, %130 : vector<1x128xf32>
    %136 = vector.extract_strided_slice %15 {offsets = [6, 0], sizes = [1, 512], strides = [1, 1]} : vector<8x512xf32> to vector<1x512xf32>
    %c0_50 = arith.constant 0 : index
    %c0_51 = arith.constant 0 : index
    %137 = vector.load %arg2[%c0_50, %c0_51] : memref<128x512xf32, #tpu.memory_space<vmem>>, vector<128x512xf32>
    %cst_52 = arith.constant dense<0.000000e+00> : vector<1x512xf32>
    %138 = tpu.matmul %135, %137, %cst_52 {dimension_numbers = #tpu.dot_dimension_numbers<[1], [0], [0], [1], [0, 0, 1, 1], [], []>} : vector<1x128xf32>, vector<128x512xf32>, vector<1x512xf32> -> vector<1x512xf32>
    %139 = arith.addf %138, %136 : vector<1x512xf32>
    %cst_53 = arith.constant 5.000000e-01 : f32
    %140 = vector.broadcast %cst_53 : f32 to vector<1x512xf32>
    %141 = arith.mulf %140, %139 : vector<1x512xf32>
    %142 = math.tanh %141 : vector<1x512xf32>
    %cst_54 = arith.constant 5.000000e-01 : f32
    %143 = vector.broadcast %cst_54 : f32 to vector<1x512xf32>
    %144 = arith.mulf %143, %142 : vector<1x512xf32>
    %cst_55 = arith.constant 5.000000e-01 : f32
    %145 = vector.broadcast %cst_55 : f32 to vector<1x512xf32>
    %146 = arith.addf %144, %145 : vector<1x512xf32>
    %147 = vector.extract_strided_slice %146 {offsets = [0, 0], sizes = [1, 128], strides = [1, 1]} : vector<1x512xf32> to vector<1x128xf32>
    %148 = vector.extract_strided_slice %146 {offsets = [0, 128], sizes = [1, 128], strides = [1, 1]} : vector<1x512xf32> to vector<1x128xf32>
    %149 = vector.extract_strided_slice %146 {offsets = [0, 256], sizes = [1, 128], strides = [1, 1]} : vector<1x512xf32> to vector<1x128xf32>
    %150 = vector.extract_strided_slice %146 {offsets = [0, 384], sizes = [1, 128], strides = [1, 1]} : vector<1x512xf32> to vector<1x128xf32>
    %151 = arith.mulf %147, %133 : vector<1x128xf32>
    %152 = arith.mulf %149, %148 : vector<1x128xf32>
    %153 = arith.addf %151, %152 : vector<1x128xf32>
    %154 = math.tanh %153 : vector<1x128xf32>
    %155 = arith.mulf %154, %150 : vector<1x128xf32>
    %156 = vector.extract_strided_slice %15 {offsets = [7, 0], sizes = [1, 512], strides = [1, 1]} : vector<8x512xf32> to vector<1x512xf32>
    %c0_56 = arith.constant 0 : index
    %c0_57 = arith.constant 0 : index
    %157 = vector.load %arg2[%c0_56, %c0_57] : memref<128x512xf32, #tpu.memory_space<vmem>>, vector<128x512xf32>
    %cst_58 = arith.constant dense<0.000000e+00> : vector<1x512xf32>
    %158 = tpu.matmul %155, %157, %cst_58 {dimension_numbers = #tpu.dot_dimension_numbers<[1], [0], [0], [1], [0, 0, 1, 1], [], []>} : vector<1x128xf32>, vector<128x512xf32>, vector<1x512xf32> -> vector<1x512xf32>
    %159 = arith.addf %158, %156 : vector<1x512xf32>
    %cst_59 = arith.constant 5.000000e-01 : f32
    %160 = vector.broadcast %cst_59 : f32 to vector<1x512xf32>
    %161 = arith.mulf %160, %159 : vector<1x512xf32>
    %162 = math.tanh %161 : vector<1x512xf32>
    %cst_60 = arith.constant 5.000000e-01 : f32
    %163 = vector.broadcast %cst_60 : f32 to vector<1x512xf32>
    %164 = arith.mulf %163, %162 : vector<1x512xf32>
    %cst_61 = arith.constant 5.000000e-01 : f32
    %165 = vector.broadcast %cst_61 : f32 to vector<1x512xf32>
    %166 = arith.addf %164, %165 : vector<1x512xf32>
    %167 = vector.extract_strided_slice %166 {offsets = [0, 0], sizes = [1, 128], strides = [1, 1]} : vector<1x512xf32> to vector<1x128xf32>
    %168 = vector.extract_strided_slice %166 {offsets = [0, 128], sizes = [1, 128], strides = [1, 1]} : vector<1x512xf32> to vector<1x128xf32>
    %169 = vector.extract_strided_slice %166 {offsets = [0, 256], sizes = [1, 128], strides = [1, 1]} : vector<1x512xf32> to vector<1x128xf32>
    %170 = vector.extract_strided_slice %166 {offsets = [0, 384], sizes = [1, 128], strides = [1, 1]} : vector<1x512xf32> to vector<1x128xf32>
    %171 = arith.mulf %167, %153 : vector<1x128xf32>
    %172 = arith.mulf %169, %168 : vector<1x128xf32>
    %173 = arith.addf %171, %172 : vector<1x128xf32>
    %174 = math.tanh %173 : vector<1x128xf32>
    %175 = arith.mulf %174, %170 : vector<1x128xf32>
    %176 = tpu.concatenate %35, %55, %75, %95, %115, %135, %155, %175 in 0 : vector<1x128xf32>, vector<1x128xf32>, vector<1x128xf32>, vector<1x128xf32>, vector<1x128xf32>, vector<1x128xf32>, vector<1x128xf32>, vector<1x128xf32> -> vector<8x128xf32>
    %177 = arith.index_cast %13 : i32 to index
    %c0_62 = arith.constant 0 : index
    %178 = vector.load %arg5[%177, %c0_62] : memref<8x128xf32, #tpu.memory_space<vmem>>, vector<8x128xf32>
    tpu.vector_store %arg5[%177, %c0_62], %176 {strides = array<i32>} : memref<8x128xf32, #tpu.memory_space<vmem>>, vector<8x128xf32>,
    %c1_i32 = arith.constant 1 : i32
    %c0_63 = arith.constant 0 : index
    %c0_64 = arith.constant 0 : index
    %179 = vector.load %arg6[%c0_63, %c0_64] : memref<1x128xf32, #tpu.memory_space<vmem>>, vector<1x128xf32>
    tpu.vector_store %arg6[%c0_63, %c0_64], %175 {strides = array<i32>} : memref<1x128xf32, #tpu.memory_space<vmem>>, vector<1x128xf32>,
    %c0_65 = arith.constant 0 : index
    %c0_66 = arith.constant 0 : index
    %180 = vector.load %arg7[%c0_65, %c0_66] : memref<1x128xf32, #tpu.memory_space<vmem>>, vector<1x128xf32>
    tpu.vector_store %arg7[%c0_65, %c0_66], %173 {strides = array<i32>} : memref<1x128xf32, #tpu.memory_space<vmem>>, vector<1x128xf32>,
    return
  }
  func.func @transform_0(%arg0: i32) -> (i32, i32) {
    %c0_i32 = arith.constant 0 : i32
    %c0_i32_0 = arith.constant 0 : i32
    return %arg0, %c0_i32 : i32, i32
  }
  func.func @transform_1(%arg0: i32) -> (i32, i32) {
    %c0_i32 = arith.constant 0 : i32
    %c0_i32_0 = arith.constant 0 : i32
    %c0_i32_1 = arith.constant 0 : i32
    return %c0_i32, %c0_i32_0 : i32, i32
  }
  func.func @transform_2(%arg0: i32) -> (i32, i32) {
    %c0_i32 = arith.constant 0 : i32
    %c0_i32_0 = arith.constant 0 : i32
    %c0_i32_1 = arith.constant 0 : i32
    return %c0_i32, %c0_i32_0 : i32, i32
  }
  func.func @transform_3(%arg0: i32) -> (i32, i32) {
    %c0_i32 = arith.constant 0 : i32
    %c0_i32_0 = arith.constant 0 : i32
    %c0_i32_1 = arith.constant 0 : i32
    return %c0_i32, %c0_i32_0 : i32, i32
  }
  func.func @transform_4(%arg0: i32) -> (i32, i32) {
    %c0_i32 = arith.constant 0 : i32
    %c0_i32_0 = arith.constant 0 : i32
    return %arg0, %c0_i32 : i32, i32
  }
}

</mosaic_0001>

<llo_original>
// kernel: tpu_custom_call.1
$region0: #{tpu_custom_call.1}
  #allocation0 [shape = 'u32[]', space=smem, size = 0x4, offset = 0x4, fixed_abs, tag = 'smem constant byte address 0x4 - core index']
  #allocation1 [shape = 'u32[144,128]{1,0:T(1,128)}', space=vmem, size = 0x12000, scoped, tag = 'internal scratch']
  #allocation2 [shape = 'f32[1,128]{1,0:T(1,128)}', space=vmem, size = 0x200, scoped, tag = 'scratch operand']
  #allocation3 [shape = 'f32[1,128]{1,0:T(1,128)}', space=vmem, size = 0x200, scoped, tag = 'scratch operand']
  #allocation4 [shape = 'f32[8,512]{1,0:T(8,128)}', space=vmem, size = 0x4000, scoped, tag = 'scratch operand']
  %s0 = inlined_call_operand.hbm [shape: f32[8,16], index: 0, kind: input, shape index: {}]
  %s1 = inlined_call_operand.hbm [shape: f32[128,512], index: 1, kind: input, shape index: {}]
  %s2 = inlined_call_operand.hbm [shape: f32[16,512], index: 2, kind: input, shape index: {}]
  %s3 = inlined_call_operand.vmem [shape: f32[1,512], index: 3, kind: input, shape index: {}]
  %s4 = inlined_call_operand.hbm [shape: f32[8,128], index: 4, kind: output, shape index: {}]
  %s5 = sld [smem:[#allocation0]]
  $region42: #{tpu_custom_call.1} parent=0
    _
  %s7 = ssub.s32 1, %s5
  %s8 = scalar_select 0, %s7, %s5
  $region1: #{tpu_custom_call.1} parent=0
    #allocation5 [shape = 'u8[4096]{0}', space=vmem, size = 0x1000, scoped, tag = 'input window, operand 0, single buffered']
    #allocation6 [shape = 's32[1]{0}', space=sflag, size = 0x4, scoped, tag = 'scoped memory for tpu_custom_call.1']
    #allocation7 [shape = 's32[1]{0}', space=sflag, size = 0x4, scoped, tag = 'scoped memory for tpu_custom_call.1']
    #allocation8 [shape = 'u8[262144]{0}', space=vmem, size = 0x40000, scoped, tag = 'input window, operand 1, single buffered']
    #allocation9 [shape = 's32[1]{0}', space=sflag, size = 0x4, scoped, tag = 'scoped memory for tpu_custom_call.1']
    #allocation10 [shape = 'u8[32768]{0}', space=vmem, size = 0x8000, scoped, tag = 'input window, operand 2, single buffered']
    #allocation11 [shape = 'u8[4096]{0}', space=vmem, size = 0x1000, scoped, tag = 'output window, operand 0, single buffered']
    %9 = vsyncpa [#allocation6], 0
    %10 = vsyncpa [#allocation9], 0
    %11 = vsyncpa [#allocation7], 0
    // Predicated region
    $region2: #{tpu_custom_call.1} parent=1 // pred_check
      _
    $region3: #{tpu_custom_call.1} parent=1 // pred_check_branch
      %13 = sbr.rel (0) target = $region5
    $region4: #{tpu_custom_call.1} parent=1 // pred_region
      %s15 = ssub.s32 128, 128
      %16 = vsyncadd [#allocation6], %s15
      %s18 = sshll.u32 [#allocation5], 4
      %s19 = int_to_ptr.vmem [resolvable:$true] %s18
      %21 = dma.hbm_to_vmem [thread:$0]  %s0, 128, %s19, [#allocation6]
    $region5: #{tpu_custom_call.1} parent=1 // pred_fallthru
      _
    // Predicated region
    $region6: #{tpu_custom_call.1} parent=1 // pred_check
      _
    $region7: #{tpu_custom_call.1} parent=1 // pred_check_branch
      %23 = sbr.rel (0) target = $region9
    $region8: #{tpu_custom_call.1} parent=1 // pred_region
      %s25 = ssub.s32 8192, 8192
      %26 = vsyncadd [#allocation9], %s25
      %s27 = sshll.u32 [#allocation8], 4
      %s28 = int_to_ptr.vmem [resolvable:$true] %s27
      %33 = dma.hbm_to_vmem [thread:$0]  %s1, 8192, %s28, [#allocation9], 512, 512, 32
    $region9: #{tpu_custom_call.1} parent=1 // pred_fallthru
      _
    // Predicated region
    $region10: #{tpu_custom_call.1} parent=1 // pred_check
      _
    $region11: #{tpu_custom_call.1} parent=1 // pred_check_branch
      %35 = sbr.rel (0) target = $region13
    $region12: #{tpu_custom_call.1} parent=1 // pred_region
      %s37 = ssub.s32 1024, 1024
      %38 = vsyncadd [#allocation9], %s37
      %s39 = sshll.u32 [#allocation10], 4
      %s40 = int_to_ptr.vmem [resolvable:$true] %s39
      %45 = dma.hbm_to_vmem [thread:$0]  %s2, 1024, %s40, [#allocation9], 512, 512, 32
    $region13: #{tpu_custom_call.1} parent=1 // pred_fallthru
      _
    // Predicated region
    $region14: #{tpu_custom_call.1} parent=1 // pred_check
      _
    $region15: #{tpu_custom_call.1} parent=1 // pred_check_branch
      %47 = sbr.rel (0) target = $region17
    $region16: #{tpu_custom_call.1} parent=1 // pred_region
      _
    $region17: #{tpu_custom_call.1} parent=1 // pred_fallthru
      _
    // Predicated region
    $region18: #{tpu_custom_call.1} parent=1 // pred_check
      _
    $region19: #{tpu_custom_call.1} parent=1 // pred_check_branch
      %49 = sbr.rel (0) target = $region21
    $region20: #{tpu_custom_call.1} parent=1 // pred_region
      %50 = dma.done [#allocation6], 128
    $region21: #{tpu_custom_call.1} parent=1 // pred_fallthru
      _
    // Predicated region
    $region22: #{tpu_custom_call.1} parent=1 // pred_check
      _
    $region23: #{tpu_custom_call.1} parent=1 // pred_check_branch
      %52 = sbr.rel (0) target = $region25
    $region24: #{tpu_custom_call.1} parent=1 // pred_region
      %53 = dma.done [#allocation9], 8192
    $region25: #{tpu_custom_call.1} parent=1 // pred_fallthru
      _
    // Predicated region
    $region26: #{tpu_custom_call.1} parent=1 // pred_check
      _
    $region27: #{tpu_custom_call.1} parent=1 // pred_check_branch
      %55 = sbr.rel (0) target = $region29
    $region28: #{tpu_custom_call.1} parent=1 // pred_region
      %56 = dma.done [#allocation9], 1024
    $region29: #{tpu_custom_call.1} parent=1 // pred_fallthru
      _
    %p57 = scmp.eq.s32.totalorder 0, 0
    // Predicated region
    $region30: #{tpu_custom_call.1} parent=1 // pred_check
      %p58 = pneg %p57
    $region31: #{tpu_custom_call.1} parent=1 // pred_check_branch
      %60 = sbr.rel (%p58) target = $region33
    $region32: #{tpu_custom_call.1} parent=1 // pred_region
      %61 = vst [vmem:[#allocation2] sm:$0x1] 0.0
      %62 = vst [vmem:[#allocation3] sm:$0x1] 0.0
    $region33: #{tpu_custom_call.1} parent=1 // pred_fallthru
      _
    %v63 = vld [vmem:[#allocation5] sm:$0xff]
    %v64 = vld [vmem:[#allocation10] sm:$0xff]
    %v65 = vld [vmem:[#allocation10 + $0x8] sm:$0xff]
    %v66 = vld [vmem:[#allocation10 + $0x10] sm:$0xff]
    %v67 = vld [vmem:[#allocation10 + $0x18] sm:$0xff]
    %v68 = vld [vmem:[#allocation10 + $0x20] sm:$0xff]
    %v69 = vld [vmem:[#allocation10 + $0x28] sm:$0xff]
    %v70 = vld [vmem:[#allocation10 + $0x30] sm:$0xff]
    %v71 = vld [vmem:[#allocation10 + $0x38] sm:$0xff]
    %v72 = vld [vmem:[%s3] sm:$0xf]
    %v74 = vlaneseq
    %v75 = vshrl.u32 %v74, 7
    %v76 = vsub.s32 0, %v75
    %v77 = vrot.slane %v72, %v76
    %v78 = vlaneseq
    %v79 = vshrl.u32 %v78, 7
    %v80 = vsub.s32 1, %v79
    %v81 = vrot.slane %v72, %v80
    %v82 = vlaneseq
    %v83 = vshrl.u32 %v82, 7
    %v84 = vsub.s32 2, %v83
    %v85 = vrot.slane %v72, %v84
    %v86 = vlaneseq
    %v87 = vshrl.u32 %v86, 7
    %v88 = vsub.s32 3, %v87
    %v89 = vrot.slane %v72, %v88
    %vm94 = vcmask 130048
    %v96 = vsel %vm94, %v63, 0
    %98 = vmatprep.subr.mxu0 %v65
    %99 = vmatpush1.msra.mxu0 %v64
    %100 = vmatprep.subr.mxu0 %v69
    %101 = vmatpush1.msra.mxu0 %v68
    %102 = vmatprep.subr.mxu0 0.0
    %103 = vmatpush1.msra.mxu0 0.0
    %104 = vmatprep.subr.mxu0 0.0
    %105 = vmatpush1.msra.mxu0 0.0
    %106 = vmatprep.subr.mxu0 0.0
    %107 = vmatpush1.msra.mxu0 0.0
    %108 = vmatprep.subr.mxu0 0.0
    %109 = vmatpush1.msra.mxu0 0.0
    %110 = vmatprep.subr.mxu0 0.0
    %111 = vmatpush1.msra.mxu0 0.0
    %112 = vmatprep.subr.mxu0 0.0
    %113 = vmatpush1.msra.mxu0 0.0
    %114 = vmatprep.subr.mxu0 0.0
    %115 = vmatpush1.msra.mxu0 0.0
    %116 = vmatprep.subr.mxu0 0.0
    %117 = vmatpush1.msra.mxu0 0.0
    %118 = vmatprep.subr.mxu0 0.0
    %119 = vmatpush1.msra.mxu0 0.0
    %120 = vmatprep.subr.mxu0 0.0
    %121 = vmatpush1.msra.mxu0 0.0
    %122 = vmatprep.subr.mxu0 0.0
    %123 = vmatpush1.msra.mxu0 0.0
    %124 = vmatprep.subr.mxu0 0.0
    %125 = vmatpush1.msra.mxu0 0.0
    %126 = vmatprep.subr.mxu0 0.0
    %127 = vmatpush1.msra.mxu0 0.0
    %128 = vmatprep.subr.mxu0 0.0
    %129 = vmatpush1.msra.mxu0 0.0
    %130 = vmatprep.subr.mxu0 0.0
    %131 = vmatpush1.msra.mxu0 0.0
    %132 = vmatprep.subr.mxu0 0.0
    %133 = vmatpush1.msra.mxu0 0.0
    %134 = vmatprep.subr.mxu0 0.0
    %135 = vmatpush1.msra.mxu0 0.0
    %136 = vmatprep.subr.mxu0 0.0
    %137 = vmatpush1.msra.mxu0 0.0
    %138 = vmatprep.subr.mxu0 0.0
    %139 = vmatpush1.msra.mxu0 0.0
    %140 = vmatprep.subr.mxu0 0.0
    %141 = vmatpush1.msra.mxu0 0.0
    %142 = vmatprep.subr.mxu0 0.0
    %143 = vmatpush1.msra.mxu0 0.0
    %144 = vmatprep.subr.mxu0 0.0
    %145 = vmatpush1.msra.mxu0 0.0
    %146 = vmatprep.subr.mxu0 0.0
    %147 = vmatpush1.msra.mxu0 0.0
    %148 = vmatprep.subr.mxu0 0.0
    %149 = vmatpush1.msra.mxu0 0.0
    %150 = vmatprep.subr.mxu0 0.0
    %151 = vmatpush1.msra.mxu0 0.0
    %152 = vmatprep.subr.mxu0 0.0
    %153 = vmatpush1.msra.mxu0 0.0
    %154 = vmatprep.subr.mxu0 0.0
    %155 = vmatpush1.msra.mxu0 0.0
    %156 = vmatprep.subr.mxu0 0.0
    %157 = vmatpush1.msra.mxu0 0.0
    %158 = vmatprep.subr.mxu0 0.0
    %159 = vmatpush1.msra.mxu0 0.0
    %160 = vmatprep.subr.mxu0 0.0
    %161 = vmatpush1.msra.mxu0 0.0
    %162 = vmatprep.mubr.f32.mxu0 0.0
    %163 = vmatmul.mubr.f32.gmra.mrb[0].mxu0 %v96
    %v164 = vpop.f32.mrb[0].mxu0
    %v165 = vadd.f32 %v77, %v164
    %v166 = vpop.f32.mrb[0].mxu0
    %v167 = vadd.f32 %v81, %v166
    %168 = vdwg.mxu0
    %169 = vmatprep.subr.mxu0 %v67
    %170 = vmatpush1.msra.mxu0 %v66
    %171 = vmatprep.subr.mxu0 %v71
    %172 = vmatpush1.msra.mxu0 %v70
    %173 = vmatprep.subr.mxu0 0.0
    %174 = vmatpush1.msra.mxu0 0.0
    %175 = vmatprep.subr.mxu0 0.0
    %176 = vmatpush1.msra.mxu0 0.0
    %177 = vmatprep.subr.mxu0 0.0
    %178 = vmatpush1.msra.mxu0 0.0
    %179 = vmatprep.subr.mxu0 0.0
    %180 = vmatpush1.msra.mxu0 0.0
    %181 = vmatprep.subr.mxu0 0.0
    %182 = vmatpush1.msra.mxu0 0.0
    %183 = vmatprep.subr.mxu0 0.0
    %184 = vmatpush1.msra.mxu0 0.0
    %185 = vmatprep.subr.mxu0 0.0
    %186 = vmatpush1.msra.mxu0 0.0
    %187 = vmatprep.subr.mxu0 0.0
    %188 = vmatpush1.msra.mxu0 0.0
    %189 = vmatprep.subr.mxu0 0.0
    %190 = vmatpush1.msra.mxu0 0.0
    %191 = vmatprep.subr.mxu0 0.0
    %192 = vmatpush1.msra.mxu0 0.0
    %193 = vmatprep.subr.mxu0 0.0
    %194 = vmatpush1.msra.mxu0 0.0
    %195 = vmatprep.subr.mxu0 0.0
    %196 = vmatpush1.msra.mxu0 0.0
    %197 = vmatprep.subr.mxu0 0.0
    %198 = vmatpush1.msra.mxu0 0.0
    %199 = vmatprep.subr.mxu0 0.0
    %200 = vmatpush1.msra.mxu0 0.0
    %201 = vmatprep.subr.mxu0 0.0
    %202 = vmatpush1.msra.mxu0 0.0
    %203 = vmatprep.subr.mxu0 0.0
    %204 = vmatpush1.msra.mxu0 0.0
    %205 = vmatprep.subr.mxu0 0.0
    %206 = vmatpush1.msra.mxu0 0.0
    %207 = vmatprep.subr.mxu0 0.0
    %208 = vmatpush1.msra.mxu0 0.0
    %209 = vmatprep.subr.mxu0 0.0
    %210 = vmatpush1.msra.mxu0 0.0
    %211 = vmatprep.subr.mxu0 0.0
    %212 = vmatpush1.msra.mxu0 0.0
    %213 = vmatprep.subr.mxu0 0.0
    %214 = vmatpush1.msra.mxu0 0.0
    %215 = vmatprep.subr.mxu0 0.0
    %216 = vmatpush1.msra.mxu0 0.0
    %217 = vmatprep.subr.mxu0 0.0
    %218 = vmatpush1.msra.mxu0 0.0
    %219 = vmatprep.subr.mxu0 0.0
    %220 = vmatpush1.msra.mxu0 0.0
    %221 = vmatprep.subr.mxu0 0.0
    %222 = vmatpush1.msra.mxu0 0.0
    %223 = vmatprep.subr.mxu0 0.0
    %224 = vmatpush1.msra.mxu0 0.0
    %225 = vmatprep.subr.mxu0 0.0
    %226 = vmatpush1.msra.mxu0 0.0
    %227 = vmatprep.subr.mxu0 0.0
    %228 = vmatpush1.msra.mxu0 0.0
    %229 = vmatprep.subr.mxu0 0.0
    %230 = vmatpush1.msra.mxu0 0.0
    %231 = vmatprep.subr.mxu0 0.0
    %232 = vmatpush1.msra.mxu0 0.0
    %233 = vmatprep.mubr.f32.mxu0 0.0
    %234 = vmatmul.mubr.f32.gmra.mrb[0].mxu0 %v96
    %v235 = vpop.f32.mrb[0].mxu0
    %v236 = vadd.f32 %v85, %v235
    %v237 = vpop.f32.mrb[0].mxu0
    %v238 = vadd.f32 %v89, %v237
    %239 = vdwg.mxu0
    %240 = vst [vmem:[#allocation4] sm:$0xff] %v165
    %241 = vst [vmem:[#allocation4 + $0x8] sm:$0xff] %v167
    %242 = vst [vmem:[#allocation4 + $0x10] sm:$0xff] %v236
    %243 = vst [vmem:[#allocation4 + $0x18] sm:$0xff] %v238
    %v244 = vld [vmem:[#allocation2] sm:$0x1]
    %v245 = vld [vmem:[#allocation3] sm:$0x1]
    %s246 = smul.u32 0, 4
    %s247 = smul.addr %s246, 8
    %s248 = scalar_lea.vmem [#allocation4], %s247
    %v249 = vld [vmem:[%s248] sm:$0xff]
    %v250 = vld [vmem:[%s248 + $0x8] sm:$0xff]
    %v251 = vld [vmem:[%s248 + $0x10] sm:$0xff]
    %v252 = vld [vmem:[%s248 + $0x18] sm:$0xff]
    %v253 = vld [vmem:[#allocation8] sm:$0xff]
    %v254 = vld [vmem:[#allocation8 + $0x8] sm:$0xff]
    %v255 = vld [vmem:[#allocation8 + $0x10] sm:$0xff]
    %v256 = vld [vmem:[#allocation8 + $0x18] sm:$0xff]
    %v257 = vld [vmem:[#allocation8 + $0x20] sm:$0xff]
    %v258 = vld [vmem:[#allocation8 + $0x28] sm:$0xff]
    %v259 = vld [vmem:[#allocation8 + $0x30] sm:$0xff]
    %v260 = vld [vmem:[#allocation8 + $0x38] sm:$0xff]
    %v261 = vld [vmem:[#allocation8 + $0x40] sm:$0xff]
    %v262 = vld [vmem:[#allocation8 + $0x48] sm:$0xff]
    %v263 = vld [vmem:[#allocation8 + $0x50] sm:$0xff]
    %v264 = vld [vmem:[#allocation8 + $0x58] sm:$0xff]
    %v265 = vld [vmem:[#allocation8 + $0x60] sm:$0xff]
    %v266 = vld [vmem:[#allocation8 + $0x68] sm:$0xff]
    %v267 = vld [vmem:[#allocation8 + $0x70] sm:$0xff]
    %v268 = vld [vmem:[#allocation8 + $0x78] sm:$0xff]
    %v269 = vld [vmem:[#allocation8 + $0x80] sm:$0xff]
    %v270 = vld [vmem:[#allocation8 + $0x88] sm:$0xff]
    %v271 = vld [vmem:[#allocation8 + $0x90] sm:$0xff]
    %v272 = vld [vmem:[#allocation8 + $0x98] sm:$0xff]
    %v273 = vld [vmem:[#allocation8 + $0xa0] sm:$0xff]
    %v274 = vld [vmem:[#allocation8 + $0xa8] sm:$0xff]
    %v275 = vld [vmem:[#allocation8 + $0xb0] sm:$0xff]
    %v276 = vld [vmem:[#allocation8 + $0xb8] sm:$0xff]
    %v277 = vld [vmem:[#allocation8 + $0xc0] sm:$0xff]
    %v278 = vld [vmem:[#allocation8 + $0xc8] sm:$0xff]
    %v279 = vld [vmem:[#allocation8 + $0xd0] sm:$0xff]
    %v280 = vld [vmem:[#allocation8 + $0xd8] sm:$0xff]
    %v281 = vld [vmem:[#allocation8 + $0xe0] sm:$0xff]
    %v282 = vld [vmem:[#allocation8 + $0xe8] sm:$0xff]
    %v283 = vld [vmem:[#allocation8 + $0xf0] sm:$0xff]
    %v284 = vld [vmem:[#allocation8 + $0xf8] sm:$0xff]
    %v285 = vld [vmem:[#allocation8 + $0x100] sm:$0xff]
    %v286 = vld [vmem:[#allocation8 + $0x108] sm:$0xff]
    %v287 = vld [vmem:[#allocation8 + $0x110] sm:$0xff]
    %v288 = vld [vmem:[#allocation8 + $0x118] sm:$0xff]
    %v289 = vld [vmem:[#allocation8 + $0x120] sm:$0xff]
    %v290 = vld [vmem:[#allocation8 + $0x128] sm:$0xff]
    %v291 = vld [vmem:[#allocation8 + $0x130] sm:$0xff]
    %v292 = vld [vmem:[#allocation8 + $0x138] sm:$0xff]
    %v293 = vld [vmem:[#allocation8 + $0x140] sm:$0xff]
    %v294 = vld [vmem:[#allocation8 + $0x148] sm:$0xff]
    %v295 = vld [vmem:[#allocation8 + $0x150] sm:$0xff]
    %v296 = vld [vmem:[#allocation8 + $0x158] sm:$0xff]
    %v297 = vld [vmem:[#allocation8 + $0x160] sm:$0xff]
    %v298 = vld [vmem:[#allocation8 + $0x168] sm:$0xff]
    %v299 = vld [vmem:[#allocation8 + $0x170] sm:$0xff]
    %v300 = vld [vmem:[#allocation8 + $0x178] sm:$0xff]
    %v301 = vld [vmem:[#allocation8 + $0x180] sm:$0xff]
    %v302 = vld [vmem:[#allocation8 + $0x188] sm:$0xff]
    %v303 = vld [vmem:[#allocation8 + $0x190] sm:$0xff]
    %v304 = vld [vmem:[#allocation8 + $0x198] sm:$0xff]
    %v305 = vld [vmem:[#allocation8 + $0x1a0] sm:$0xff]
    %v306 = vld [vmem:[#allocation8 + $0x1a8] sm:$0xff]
    %v307 = vld [vmem:[#allocation8 + $0x1b0] sm:$0xff]
    %v308 = vld [vmem:[#allocation8 + $0x1b8] sm:$0xff]
    %v309 = vld [vmem:[#allocation8 + $0x1c0] sm:$0xff]
    %v310 = vld [vmem:[#allocation8 + $0x1c8] sm:$0xff]
    %v311 = vld [vmem:[#allocation8 + $0x1d0] sm:$0xff]
    %v312 = vld [vmem:[#allocation8 + $0x1d8] sm:$0xff]
    %v313 = vld [vmem:[#allocation8 + $0x1e0] sm:$0xff]
    %v314 = vld [vmem:[#allocation8 + $0x1e8] sm:$0xff]
    %v315 = vld [vmem:[#allocation8 + $0x1f0] sm:$0xff]
    %v316 = vld [vmem:[#allocation8 + $0x1f8] sm:$0xff]
    %317 = vmatprep.subr.mxu0 %v254
    %318 = vmatpush1.msra.mxu0 %v253
    %319 = vmatprep.subr.mxu0 %v258
    %320 = vmatpush1.msra.mxu0 %v257
    %321 = vmatprep.subr.mxu0 %v262
    %322 = vmatpush1.msra.mxu0 %v261
    %323 = vmatprep.subr.mxu0 %v266
    %324 = vmatpush1.msra.mxu0 %v265
    %325 = vmatprep.subr.mxu0 %v270
    %326 = vmatpush1.msra.mxu0 %v269
    %327 = vmatprep.subr.mxu0 %v274
    %328 = vmatpush1.msra.mxu0 %v273
    %329 = vmatprep.subr.mxu0 %v278
    %330 = vmatpush1.msra.mxu0 %v277
    %331 = vmatprep.subr.mxu0 %v282
    %332 = vmatpush1.msra.mxu0 %v281
    %333 = vmatprep.subr.mxu0 %v286
    %334 = vmatpush1.msra.mxu0 %v285
    %335 = vmatprep.subr.mxu0 %v290
    %336 = vmatpush1.msra.mxu0 %v289
    %337 = vmatprep.subr.mxu0 %v294
    %338 = vmatpush1.msra.mxu0 %v293
    %339 = vmatprep.subr.mxu0 %v298
    %340 = vmatpush1.msra.mxu0 %v297
    %341 = vmatprep.subr.mxu0 %v302
    %342 = vmatpush1.msra.mxu0 %v301
    %343 = vmatprep.subr.mxu0 %v306
    %344 = vmatpush1.msra.mxu0 %v305
    %345 = vmatprep.subr.mxu0 %v310
    %346 = vmatpush1.msra.mxu0 %v309
    %347 = vmatprep.subr.mxu0 %v314
    %348 = vmatpush1.msra.mxu0 %v313
    %349 = vmatprep.subr.mxu0 0.0
    %350 = vmatpush1.msra.mxu0 0.0
    %351 = vmatprep.subr.mxu0 0.0
    %352 = vmatpush1.msra.mxu0 0.0
    %353 = vmatprep.subr.mxu0 0.0
    %354 = vmatpush1.msra.mxu0 0.0
    %355 = vmatprep.subr.mxu0 0.0
    %356 = vmatpush1.msra.mxu0 0.0
    %357 = vmatprep.subr.mxu0 0.0
    %358 = vmatpush1.msra.mxu0 0.0
    %359 = vmatprep.subr.mxu0 0.0
    %360 = vmatpush1.msra.mxu0 0.0
    %361 = vmatprep.subr.mxu0 0.0
    %362 = vmatpush1.msra.mxu0 0.0
    %363 = vmatprep.subr.mxu0 0.0
    %364 = vmatpush1.msra.mxu0 0.0
    %365 = vmatprep.subr.mxu0 0.0
    %366 = vmatpush1.msra.mxu0 0.0
    %367 = vmatprep.subr.mxu0 0.0
    %368 = vmatpush1.msra.mxu0 0.0
    %369 = vmatprep.subr.mxu0 0.0
    %370 = vmatpush1.msra.mxu0 0.0
    %371 = vmatprep.subr.mxu0 0.0
    %372 = vmatpush1.msra.mxu0 0.0
    %373 = vmatprep.subr.mxu0 0.0
    %374 = vmatpush1.msra.mxu0 0.0
    %375 = vmatprep.subr.mxu0 0.0
    %376 = vmatpush1.msra.mxu0 0.0
    %377 = vmatprep.subr.mxu0 0.0
    %378 = vmatpush1.msra.mxu0 0.0
    %379 = vmatprep.subr.mxu0 0.0
    %380 = vmatpush1.msra.mxu0 0.0
    %381 = vmatprep.mubr.f32.mxu0 0.0
    %382 = vmatmul.mubr.f32.gmra.mrb[0].mxu0 %v244
    %v383 = vpop.f32.mrb[0].mxu0
    %v384 = vadd.f32 %v249, %v383
    %v385 = vpop.f32.mrb[0].mxu0
    %v386 = vadd.f32 %v250, %v385
    %387 = vdwg.mxu0
    %388 = vmatprep.subr.mxu0 %v256
    %389 = vmatpush1.msra.mxu0 %v255
    %390 = vmatprep.subr.mxu0 %v260
    %391 = vmatpush1.msra.mxu0 %v259
    %392 = vmatprep.subr.mxu0 %v264
    %393 = vmatpush1.msra.mxu0 %v263
    %394 = vmatprep.subr.mxu0 %v268
    %395 = vmatpush1.msra.mxu0 %v267
    %396 = vmatprep.subr.mxu0 %v272
    %397 = vmatpush1.msra.mxu0 %v271
    %398 = vmatprep.subr.mxu0 %v276
    %399 = vmatpush1.msra.mxu0 %v275
    %400 = vmatprep.subr.mxu0 %v280
    %401 = vmatpush1.msra.mxu0 %v279
    %402 = vmatprep.subr.mxu0 %v284
    %403 = vmatpush1.msra.mxu0 %v283
    %404 = vmatprep.subr.mxu0 %v288
    %405 = vmatpush1.msra.mxu0 %v287
    %406 = vmatprep.subr.mxu0 %v292
    %407 = vmatpush1.msra.mxu0 %v291
    %408 = vmatprep.subr.mxu0 %v296
    %409 = vmatpush1.msra.mxu0 %v295
    %410 = vmatprep.subr.mxu0 %v300
    %411 = vmatpush1.msra.mxu0 %v299
    %412 = vmatprep.subr.mxu0 %v304
    %413 = vmatpush1.msra.mxu0 %v303
    %414 = vmatprep.subr.mxu0 %v308
    %415 = vmatpush1.msra.mxu0 %v307
    %416 = vmatprep.subr.mxu0 %v312
    %417 = vmatpush1.msra.mxu0 %v311
    %418 = vmatprep.subr.mxu0 %v316
    %419 = vmatpush1.msra.mxu0 %v315
    %420 = vmatprep.subr.mxu0 0.0
    %421 = vmatpush1.msra.mxu0 0.0
    %422 = vmatprep.subr.mxu0 0.0
    %423 = vmatpush1.msra.mxu0 0.0
    %424 = vmatprep.subr.mxu0 0.0
    %425 = vmatpush1.msra.mxu0 0.0
    %426 = vmatprep.subr.mxu0 0.0
    %427 = vmatpush1.msra.mxu0 0.0
    %428 = vmatprep.subr.mxu0 0.0
    %429 = vmatpush1.msra.mxu0 0.0
    %430 = vmatprep.subr.mxu0 0.0
    %431 = vmatpush1.msra.mxu0 0.0
    %432 = vmatprep.subr.mxu0 0.0
    %433 = vmatpush1.msra.mxu0 0.0
    %434 = vmatprep.subr.mxu0 0.0
    %435 = vmatpush1.msra.mxu0 0.0
    %436 = vmatprep.subr.mxu0 0.0
    %437 = vmatpush1.msra.mxu0 0.0
    %438 = vmatprep.subr.mxu0 0.0
    %439 = vmatpush1.msra.mxu0 0.0
    %440 = vmatprep.subr.mxu0 0.0
    %441 = vmatpush1.msra.mxu0 0.0
    %442 = vmatprep.subr.mxu0 0.0
    %443 = vmatpush1.msra.mxu0 0.0
    %444 = vmatprep.subr.mxu0 0.0
    %445 = vmatpush1.msra.mxu0 0.0
    %446 = vmatprep.subr.mxu0 0.0
    %447 = vmatpush1.msra.mxu0 0.0
    %448 = vmatprep.subr.mxu0 0.0
    %449 = vmatpush1.msra.mxu0 0.0
    %450 = vmatprep.subr.mxu0 0.0
    %451 = vmatpush1.msra.mxu0 0.0
    %452 = vmatprep.mubr.f32.mxu0 0.0
    %453 = vmatmul.mubr.f32.gmra.mrb[0].mxu0 %v244
    %v454 = vpop.f32.mrb[0].mxu0
    %v455 = vadd.f32 %v251, %v454
    %v456 = vpop.f32.mrb[0].mxu0
    %v457 = vadd.f32 %v252, %v456
    %458 = vdwg.mxu0
    %v459 = vmul.f32 %v384, 0.5
    %v460 = vmul.f32 %v386, 0.5
    %v461 = vmul.f32 %v455, 0.5
    %v462 = vmul.f32 %v457, 0.5
    %v463 = vtanh.pop %v459
    %v464 = vtanh.pop %v460
    %v465 = vtanh.pop %v461
    %v466 = vtanh.pop %v462
    %v467 = vmul.f32 %v463, 0.5
    %v468 = vmul.f32 %v464, 0.5
    %v469 = vmul.f32 %v465, 0.5
    %v470 = vmul.f32 %v466, 0.5
    %v471 = vadd.f32 %v467, 0.5
    %v472 = vadd.f32 %v468, 0.5
    %v473 = vadd.f32 %v469, 0.5
    %v474 = vadd.f32 %v470, 0.5
    %v475 = vmul.f32 %v471, %v245
    %v476 = vmul.f32 %v473, %v472
    %v477 = vadd.f32 %v475, %v476
    %v478 = vtanh.pop %v477
    %v479 = vmul.f32 %v478, %v474
    %v484 = vrot.slane %v249, 1
    %v485 = vrot.slane %v250, 1
    %v486 = vrot.slane %v251, 1
    %v487 = vrot.slane %v252, 1
    %492 = vmatprep.subr.mxu0 %v254
    %493 = vmatpush1.msra.mxu0 %v253
    %494 = vmatprep.subr.mxu0 %v258
    %495 = vmatpush1.msra.mxu0 %v257
    %496 = vmatprep.subr.mxu0 %v262
    %497 = vmatpush1.msra.mxu0 %v261
    %498 = vmatprep.subr.mxu0 %v266
    %499 = vmatpush1.msra.mxu0 %v265
    %500 = vmatprep.subr.mxu0 %v270
    %501 = vmatpush1.msra.mxu0 %v269
    %502 = vmatprep.subr.mxu0 %v274
    %503 = vmatpush1.msra.mxu0 %v273
    %504 = vmatprep.subr.mxu0 %v278
    %505 = vmatpush1.msra.mxu0 %v277
    %506 = vmatprep.subr.mxu0 %v282
    %507 = vmatpush1.msra.mxu0 %v281
    %508 = vmatprep.subr.mxu0 %v286
    %509 = vmatpush1.msra.mxu0 %v285
    %510 = vmatprep.subr.mxu0 %v290
    %511 = vmatpush1.msra.mxu0 %v289
    %512 = vmatprep.subr.mxu0 %v294
    %513 = vmatpush1.msra.mxu0 %v293
    %514 = vmatprep.subr.mxu0 %v298
    %515 = vmatpush1.msra.mxu0 %v297
    %516 = vmatprep.subr.mxu0 %v302
    %517 = vmatpush1.msra.mxu0 %v301
    %518 = vmatprep.subr.mxu0 %v306
    %519 = vmatpush1.msra.mxu0 %v305
    %520 = vmatprep.subr.mxu0 %v310
    %521 = vmatpush1.msra.mxu0 %v309
    %522 = vmatprep.subr.mxu0 %v314
    %523 = vmatpush1.msra.mxu0 %v313
    %524 = vmatprep.subr.mxu0 0.0
    %525 = vmatpush1.msra.mxu0 0.0
    %526 = vmatprep.subr.mxu0 0.0
    %527 = vmatpush1.msra.mxu0 0.0
    %528 = vmatprep.subr.mxu0 0.0
    %529 = vmatpush1.msra.mxu0 0.0
    %530 = vmatprep.subr.mxu0 0.0
    %531 = vmatpush1.msra.mxu0 0.0
    %532 = vmatprep.subr.mxu0 0.0
    %533 = vmatpush1.msra.mxu0 0.0
    %534 = vmatprep.subr.mxu0 0.0
    %535 = vmatpush1.msra.mxu0 0.0
    %536 = vmatprep.subr.mxu0 0.0
    %537 = vmatpush1.msra.mxu0 0.0
    %538 = vmatprep.subr.mxu0 0.0
    %539 = vmatpush1.msra.mxu0 0.0
    %540 = vmatprep.subr.mxu0 0.0
    %541 = vmatpush1.msra.mxu0 0.0
    %542 = vmatprep.subr.mxu0 0.0
    %543 = vmatpush1.msra.mxu0 0.0
    %544 = vmatprep.subr.mxu0 0.0
    %545 = vmatpush1.msra.mxu0 0.0
    %546 = vmatprep.subr.mxu0 0.0
    %547 = vmatpush1.msra.mxu0 0.0
    %548 = vmatprep.subr.mxu0 0.0
    %549 = vmatpush1.msra.mxu0 0.0
    %550 = vmatprep.subr.mxu0 0.0
    %551 = vmatpush1.msra.mxu0 0.0
    %552 = vmatprep.subr.mxu0 0.0
    %553 = vmatpush1.msra.mxu0 0.0
    %554 = vmatprep.subr.mxu0 0.0
    %555 = vmatpush1.msra.mxu0 0.0
    %556 = vmatprep.mubr.f32.mxu0 0.0
    %557 = vmatmul.mubr.f32.gmra.mrb[0].mxu0 %v479
    %v558 = vpop.f32.mrb[0].mxu0
    %v559 = vadd.f32 %v484, %v558
    %v560 = vpop.f32.mrb[0].mxu0
    %v561 = vadd.f32 %v485, %v560
    %562 = vdwg.mxu0
    %563 = vmatprep.subr.mxu0 %v256
    %564 = vmatpush1.msra.mxu0 %v255
    %565 = vmatprep.subr.mxu0 %v260
    %566 = vmatpush1.msra.mxu0 %v259
    %567 = vmatprep.subr.mxu0 %v264
    %568 = vmatpush1.msra.mxu0 %v263
    %569 = vmatprep.subr.mxu0 %v268
    %570 = vmatpush1.msra.mxu0 %v267
    %571 = vmatprep.subr.mxu0 %v272
    %572 = vmatpush1.msra.mxu0 %v271
    %573 = vmatprep.subr.mxu0 %v276
    %574 = vmatpush1.msra.mxu0 %v275
    %575 = vmatprep.subr.mxu0 %v280
    %576 = vmatpush1.msra.mxu0 %v279
    %577 = vmatprep.subr.mxu0 %v284
    %578 = vmatpush1.msra.mxu0 %v283
    %579 = vmatprep.subr.mxu0 %v288
    %580 = vmatpush1.msra.mxu0 %v287
    %581 = vmatprep.subr.mxu0 %v292
    %582 = vmatpush1.msra.mxu0 %v291
    %583 = vmatprep.subr.mxu0 %v296
    %584 = vmatpush1.msra.mxu0 %v295
    %585 = vmatprep.subr.mxu0 %v300
    %586 = vmatpush1.msra.mxu0 %v299
    %587 = vmatprep.subr.mxu0 %v304
    %588 = vmatpush1.msra.mxu0 %v303
    %589 = vmatprep.subr.mxu0 %v308
    %590 = vmatpush1.msra.mxu0 %v307
    %591 = vmatprep.subr.mxu0 %v312
    %592 = vmatpush1.msra.mxu0 %v311
    %593 = vmatprep.subr.mxu0 %v316
    %594 = vmatpush1.msra.mxu0 %v315
    %595 = vmatprep.subr.mxu0 0.0
    %596 = vmatpush1.msra.mxu0 0.0
    %597 = vmatprep.subr.mxu0 0.0
    %598 = vmatpush1.msra.mxu0 0.0
    %599 = vmatprep.subr.mxu0 0.0
    %600 = vmatpush1.msra.mxu0 0.0
    %601 = vmatprep.subr.mxu0 0.0
    %602 = vmatpush1.msra.mxu0 0.0
    %603 = vmatprep.subr.mxu0 0.0
    %604 = vmatpush1.msra.mxu0 0.0
    %605 = vmatprep.subr.mxu0 0.0
    %606 = vmatpush1.msra.mxu0 0.0
    %607 = vmatprep.subr.mxu0 0.0
    %608 = vmatpush1.msra.mxu0 0.0
    %609 = vmatprep.subr.mxu0 0.0
    %610 = vmatpush1.msra.mxu0 0.0
    %611 = vmatprep.subr.mxu0 0.0
    %612 = vmatpush1.msra.mxu0 0.0
    %613 = vmatprep.subr.mxu0 0.0
    %614 = vmatpush1.msra.mxu0 0.0
    %615 = vmatprep.subr.mxu0 0.0
    %616 = vmatpush1.msra.mxu0 0.0
    %617 = vmatprep.subr.mxu0 0.0
    %618 = vmatpush1.msra.mxu0 0.0
    %619 = vmatprep.subr.mxu0 0.0
    %620 = vmatpush1.msra.mxu0 0.0
    %621 = vmatprep.subr.mxu0 0.0
    %622 = vmatpush1.msra.mxu0 0.0
    %623 = vmatprep.subr.mxu0 0.0
    %624 = vmatpush1.msra.mxu0 0.0
    %625 = vmatprep.subr.mxu0 0.0
    %626 = vmatpush1.msra.mxu0 0.0
    %627 = vmatprep.mubr.f32.mxu0 0.0
    %628 = vmatmul.mubr.f32.gmra.mrb[0].mxu0 %v479
    %v629 = vpop.f32.mrb[0].mxu0
    %v630 = vadd.f32 %v486, %v629
    %v631 = vpop.f32.mrb[0].mxu0
    %v632 = vadd.f32 %v487, %v631
    %633 = vdwg.mxu0
    %v634 = vmul.f32 %v559, 0.5
    %v635 = vmul.f32 %v561, 0.5
    %v636 = vmul.f32 %v630, 0.5
    %v637 = vmul.f32 %v632, 0.5
    %v638 = vtanh.pop %v634
    %v639 = vtanh.pop %v635
    %v640 = vtanh.pop %v636
    %v641 = vtanh.pop %v637
    %v642 = vmul.f32 %v638, 0.5
    %v643 = vmul.f32 %v639, 0.5
    %v644 = vmul.f32 %v640, 0.5
    %v645 = vmul.f32 %v641, 0.5
    %v646 = vadd.f32 %v642, 0.5
    %v647 = vadd.f32 %v643, 0.5
    %v648 = vadd.f32 %v644, 0.5
    %v649 = vadd.f32 %v645, 0.5
    %v650 = vmul.f32 %v646, %v477
    %v651 = vmul.f32 %v648, %v647
    %v652 = vadd.f32 %v650, %v651
    %v653 = vtanh.pop %v652
    %v654 = vmul.f32 %v653, %v649
    %v655 = vrot.slane %v249, 2
    %v656 = vrot.slane %v250, 2
    %v657 = vrot.slane %v251, 2
    %v658 = vrot.slane %v252, 2
    %663 = vmatprep.subr.mxu0 %v254
    %664 = vmatpush1.msra.mxu0 %v253
    %665 = vmatprep.subr.mxu0 %v258
    %666 = vmatpush1.msra.mxu0 %v257
    %667 = vmatprep.subr.mxu0 %v262
    %668 = vmatpush1.msra.mxu0 %v261
    %669 = vmatprep.subr.mxu0 %v266
    %670 = vmatpush1.msra.mxu0 %v265
    %671 = vmatprep.subr.mxu0 %v270
    %672 = vmatpush1.msra.mxu0 %v269
    %673 = vmatprep.subr.mxu0 %v274
    %674 = vmatpush1.msra.mxu0 %v273
    %675 = vmatprep.subr.mxu0 %v278
    %676 = vmatpush1.msra.mxu0 %v277
    %677 = vmatprep.subr.mxu0 %v282
    %678 = vmatpush1.msra.mxu0 %v281
    %679 = vmatprep.subr.mxu0 %v286
    %680 = vmatpush1.msra.mxu0 %v285
    %681 = vmatprep.subr.mxu0 %v290
    %682 = vmatpush1.msra.mxu0 %v289
    %683 = vmatprep.subr.mxu0 %v294
    %684 = vmatpush1.msra.mxu0 %v293
    %685 = vmatprep.subr.mxu0 %v298
    %686 = vmatpush1.msra.mxu0 %v297
    %687 = vmatprep.subr.mxu0 %v302
    %688 = vmatpush1.msra.mxu0 %v301
    %689 = vmatprep.subr.mxu0 %v306
    %690 = vmatpush1.msra.mxu0 %v305
    %691 = vmatprep.subr.mxu0 %v310
    %692 = vmatpush1.msra.mxu0 %v309
    %693 = vmatprep.subr.mxu0 %v314
    %694 = vmatpush1.msra.mxu0 %v313
    %695 = vmatprep.subr.mxu0 0.0
    %696 = vmatpush1.msra.mxu0 0.0
    %697 = vmatprep.subr.mxu0 0.0
    %698 = vmatpush1.msra.mxu0 0.0
    %699 = vmatprep.subr.mxu0 0.0
    %700 = vmatpush1.msra.mxu0 0.0
    %701 = vmatprep.subr.mxu0 0.0
    %702 = vmatpush1.msra.mxu0 0.0
    %703 = vmatprep.subr.mxu0 0.0
    %704 = vmatpush1.msra.mxu0 0.0
    %705 = vmatprep.subr.mxu0 0.0
    %706 = vmatpush1.msra.mxu0 0.0
    %707 = vmatprep.subr.mxu0 0.0
    %708 = vmatpush1.msra.mxu0 0.0
    %709 = vmatprep.subr.mxu0 0.0
    %710 = vmatpush1.msra.mxu0 0.0
    %711 = vmatprep.subr.mxu0 0.0
    %712 = vmatpush1.msra.mxu0 0.0
    %713 = vmatprep.subr.mxu0 0.0
    %714 = vmatpush1.msra.mxu0 0.0
    %715 = vmatprep.subr.mxu0 0.0
    %716 = vmatpush1.msra.mxu0 0.0
    %717 = vmatprep.subr.mxu0 0.0
    %718 = vmatpush1.msra.mxu0 0.0
    %719 = vmatprep.subr.mxu0 0.0
    %720 = vmatpush1.msra.mxu0 0.0
    %721 = vmatprep.subr.mxu0 0.0
    %722 = vmatpush1.msra.mxu0 0.0
    %723 = vmatprep.subr.mxu0 0.0
    %724 = vmatpush1.msra.mxu0 0.0
    %725 = vmatprep.subr.mxu0 0.0
    %726 = vmatpush1.msra.mxu0 0.0
    %727 = vmatprep.mubr.f32.mxu0 0.0
    %728 = vmatmul.mubr.f32.gmra.mrb[0].mxu0 %v654
    %v729 = vpop.f32.mrb[0].mxu0
    %v730 = vadd.f32 %v655, %v729
    %v731 = vpop.f32.mrb[0].mxu0
    %v732 = vadd.f32 %v656, %v731
    %733 = vdwg.mxu0
    %734 = vmatprep.subr.mxu0 %v256
    %735 = vmatpush1.msra.mxu0 %v255
    %736 = vmatprep.subr.mxu0 %v260
    %737 = vmatpush1.msra.mxu0 %v259
    %738 = vmatprep.subr.mxu0 %v264
    %739 = vmatpush1.msra.mxu0 %v263
    %740 = vmatprep.subr.mxu0 %v268
    %741 = vmatpush1.msra.mxu0 %v267
    %742 = vmatprep.subr.mxu0 %v272
    %743 = vmatpush1.msra.mxu0 %v271
    %744 = vmatprep.subr.mxu0 %v276
    %745 = vmatpush1.msra.mxu0 %v275
    %746 = vmatprep.subr.mxu0 %v280
    %747 = vmatpush1.msra.mxu0 %v279
    %748 = vmatprep.subr.mxu0 %v284
    %749 = vmatpush1.msra.mxu0 %v283
    %750 = vmatprep.subr.mxu0 %v288
    %751 = vmatpush1.msra.mxu0 %v287
    %752 = vmatprep.subr.mxu0 %v292
    %753 = vmatpush1.msra.mxu0 %v291
    %754 = vmatprep.subr.mxu0 %v296
    %755 = vmatpush1.msra.mxu0 %v295
    %756 = vmatprep.subr.mxu0 %v300
    %757 = vmatpush1.msra.mxu0 %v299
    %758 = vmatprep.subr.mxu0 %v304
    %759 = vmatpush1.msra.mxu0 %v303
    %760 = vmatprep.subr.mxu0 %v308
    %761 = vmatpush1.msra.mxu0 %v307
    %762 = vmatprep.subr.mxu0 %v312
    %763 = vmatpush1.msra.mxu0 %v311
    %764 = vmatprep.subr.mxu0 %v316
    %765 = vmatpush1.msra.mxu0 %v315
    %766 = vmatprep.subr.mxu0 0.0
    %767 = vmatpush1.msra.mxu0 0.0
    %768 = vmatprep.subr.mxu0 0.0
    %769 = vmatpush1.msra.mxu0 0.0
    %770 = vmatprep.subr.mxu0 0.0
    %771 = vmatpush1.msra.mxu0 0.0
    %772 = vmatprep.subr.mxu0 0.0
    %773 = vmatpush1.msra.mxu0 0.0
    %774 = vmatprep.subr.mxu0 0.0
    %775 = vmatpush1.msra.mxu0 0.0
    %776 = vmatprep.subr.mxu0 0.0
    %777 = vmatpush1.msra.mxu0 0.0
    %778 = vmatprep.subr.mxu0 0.0
    %779 = vmatpush1.msra.mxu0 0.0
    %780 = vmatprep.subr.mxu0 0.0
    %781 = vmatpush1.msra.mxu0 0.0
    %782 = vmatprep.subr.mxu0 0.0
    %783 = vmatpush1.msra.mxu0 0.0
    %784 = vmatprep.subr.mxu0 0.0
    %785 = vmatpush1.msra.mxu0 0.0
    %786 = vmatprep.subr.mxu0 0.0
    %787 = vmatpush1.msra.mxu0 0.0
    %788 = vmatprep.subr.mxu0 0.0
    %789 = vmatpush1.msra.mxu0 0.0
    %790 = vmatprep.subr.mxu0 0.0
    %791 = vmatpush1.msra.mxu0 0.0
    %792 = vmatprep.subr.mxu0 0.0
    %793 = vmatpush1.msra.mxu0 0.0
    %794 = vmatprep.subr.mxu0 0.0
    %795 = vmatpush1.msra.mxu0 0.0
    %796 = vmatprep.subr.mxu0 0.0
    %797 = vmatpush1.msra.mxu0 0.0
    %798 = vmatprep.mubr.f32.mxu0 0.0
    %799 = vmatmul.mubr.f32.gmra.mrb[0].mxu0 %v654
    %v800 = vpop.f32.mrb[0].mxu0
    %v801 = vadd.f32 %v657, %v800
    %v802 = vpop.f32.mrb[0].mxu0
    %v803 = vadd.f32 %v658, %v802
    %804 = vdwg.mxu0
    %v805 = vmul.f32 %v730, 0.5
    %v806 = vmul.f32 %v732, 0.5
    %v807 = vmul.f32 %v801, 0.5
    %v808 = vmul.f32 %v803, 0.5
    %v809 = vtanh.pop %v805
    %v810 = vtanh.pop %v806
    %v811 = vtanh.pop %v807
    %v812 = vtanh.pop %v808
    %v813 = vmul.f32 %v809, 0.5
    %v814 = vmul.f32 %v810, 0.5
    %v815 = vmul.f32 %v811, 0.5
    %v816 = vmul.f32 %v812, 0.5
    %v817 = vadd.f32 %v813, 0.5
    %v818 = vadd.f32 %v814, 0.5
    %v819 = vadd.f32 %v815, 0.5
    %v820 = vadd.f32 %v816, 0.5
    %v821 = vmul.f32 %v817, %v652
    %v822 = vmul.f32 %v819, %v818
    %v823 = vadd.f32 %v821, %v822
    %v824 = vtanh.pop %v823
    %v825 = vmul.f32 %v824, %v820
    %v826 = vrot.slane %v249, 3
    %v827 = vrot.slane %v250, 3
    %v828 = vrot.slane %v251, 3
    %v829 = vrot.slane %v252, 3
    %834 = vmatprep.subr.mxu0 %v254
    %835 = vmatpush1.msra.mxu0 %v253
    %836 = vmatprep.subr.mxu0 %v258
    %837 = vmatpush1.msra.mxu0 %v257
    %838 = vmatprep.subr.mxu0 %v262
    %839 = vmatpush1.msra.mxu0 %v261
    %840 = vmatprep.subr.mxu0 %v266
    %841 = vmatpush1.msra.mxu0 %v265
    %842 = vmatprep.subr.mxu0 %v270
    %843 = vmatpush1.msra.mxu0 %v269
    %844 = vmatprep.subr.mxu0 %v274
    %845 = vmatpush1.msra.mxu0 %v273
    %846 = vmatprep.subr.mxu0 %v278
    %847 = vmatpush1.msra.mxu0 %v277
    %848 = vmatprep.subr.mxu0 %v282
    %849 = vmatpush1.msra.mxu0 %v281
    %850 = vmatprep.subr.mxu0 %v286
    %851 = vmatpush1.msra.mxu0 %v285
    %852 = vmatprep.subr.mxu0 %v290
    %853 = vmatpush1.msra.mxu0 %v289
    %854 = vmatprep.subr.mxu0 %v294
    %855 = vmatpush1.msra.mxu0 %v293
    %856 = vmatprep.subr.mxu0 %v298
    %857 = vmatpush1.msra.mxu0 %v297
    %858 = vmatprep.subr.mxu0 %v302
    %859 = vmatpush1.msra.mxu0 %v301
    %860 = vmatprep.subr.mxu0 %v306
    %861 = vmatpush1.msra.mxu0 %v305
    %862 = vmatprep.subr.mxu0 %v310
    %863 = vmatpush1.msra.mxu0 %v309
    %864 = vmatprep.subr.mxu0 %v314
    %865 = vmatpush1.msra.mxu0 %v313
    %866 = vmatprep.subr.mxu0 0.0
    %867 = vmatpush1.msra.mxu0 0.0
    %868 = vmatprep.subr.mxu0 0.0
    %869 = vmatpush1.msra.mxu0 0.0
    %870 = vmatprep.subr.mxu0 0.0
    %871 = vmatpush1.msra.mxu0 0.0
    %872 = vmatprep.subr.mxu0 0.0
    %873 = vmatpush1.msra.mxu0 0.0
    %874 = vmatprep.subr.mxu0 0.0
    %875 = vmatpush1.msra.mxu0 0.0
    %876 = vmatprep.subr.mxu0 0.0
    %877 = vmatpush1.msra.mxu0 0.0
    %878 = vmatprep.subr.mxu0 0.0
    %879 = vmatpush1.msra.mxu0 0.0
    %880 = vmatprep.subr.mxu0 0.0
    %881 = vmatpush1.msra.mxu0 0.0
    %882 = vmatprep.subr.mxu0 0.0
    %883 = vmatpush1.msra.mxu0 0.0
    %884 = vmatprep.subr.mxu0 0.0
    %885 = vmatpush1.msra.mxu0 0.0
    %886 = vmatprep.subr.mxu0 0.0
    %887 = vmatpush1.msra.mxu0 0.0
    %888 = vmatprep.subr.mxu0 0.0
    %889 = vmatpush1.msra.mxu0 0.0
    %890 = vmatprep.subr.mxu0 0.0
    %891 = vmatpush1.msra.mxu0 0.0
    %892 = vmatprep.subr.mxu0 0.0
    %893 = vmatpush1.msra.mxu0 0.0
    %894 = vmatprep.subr.mxu0 0.0
    %895 = vmatpush1.msra.mxu0 0.0
    %896 = vmatprep.subr.mxu0 0.0
    %897 = vmatpush1.msra.mxu0 0.0
    %898 = vmatprep.mubr.f32.mxu0 0.0
    %899 = vmatmul.mubr.f32.gmra.mrb[0].mxu0 %v825
    %v900 = vpop.f32.mrb[0].mxu0
    %v901 = vadd.f32 %v826, %v900
    %v902 = vpop.f32.mrb[0].mxu0
    %v903 = vadd.f32 %v827, %v902
    %904 = vdwg.mxu0
    %905 = vmatprep.subr.mxu0 %v256
    %906 = vmatpush1.msra.mxu0 %v255
    %907 = vmatprep.subr.mxu0 %v260
    %908 = vmatpush1.msra.mxu0 %v259
    %909 = vmatprep.subr.mxu0 %v264
    %910 = vmatpush1.msra.mxu0 %v263
    %911 = vmatprep.subr.mxu0 %v268
    %912 = vmatpush1.msra.mxu0 %v267
    %913 = vmatprep.subr.mxu0 %v272
    %914 = vmatpush1.msra.mxu0 %v271
    %915 = vmatprep.subr.mxu0 %v276
    %916 = vmatpush1.msra.mxu0 %v275
    %917 = vmatprep.subr.mxu0 %v280
    %918 = vmatpush1.msra.mxu0 %v279
    %919 = vmatprep.subr.mxu0 %v284
    %920 = vmatpush1.msra.mxu0 %v283
    %921 = vmatprep.subr.mxu0 %v288
    %922 = vmatpush1.msra.mxu0 %v287
    %923 = vmatprep.subr.mxu0 %v292
    %924 = vmatpush1.msra.mxu0 %v291
    %925 = vmatprep.subr.mxu0 %v296
    %926 = vmatpush1.msra.mxu0 %v295
    %927 = vmatprep.subr.mxu0 %v300
    %928 = vmatpush1.msra.mxu0 %v299
    %929 = vmatprep.subr.mxu0 %v304
    %930 = vmatpush1.msra.mxu0 %v303
    %931 = vmatprep.subr.mxu0 %v308
    %932 = vmatpush1.msra.mxu0 %v307
    %933 = vmatprep.subr.mxu0 %v312
    %934 = vmatpush1.msra.mxu0 %v311
    %935 = vmatprep.subr.mxu0 %v316
    %936 = vmatpush1.msra.mxu0 %v315
    %937 = vmatprep.subr.mxu0 0.0
    %938 = vmatpush1.msra.mxu0 0.0
    %939 = vmatprep.subr.mxu0 0.0
    %940 = vmatpush1.msra.mxu0 0.0
    %941 = vmatprep.subr.mxu0 0.0
    %942 = vmatpush1.msra.mxu0 0.0
    %943 = vmatprep.subr.mxu0 0.0
    %944 = vmatpush1.msra.mxu0 0.0
    %945 = vmatprep.subr.mxu0 0.0
    %946 = vmatpush1.msra.mxu0 0.0
    %947 = vmatprep.subr.mxu0 0.0
    %948 = vmatpush1.msra.mxu0 0.0
    %949 = vmatprep.subr.mxu0 0.0
    %950 = vmatpush1.msra.mxu0 0.0
    %951 = vmatprep.subr.mxu0 0.0
    %952 = vmatpush1.msra.mxu0 0.0
    %953 = vmatprep.subr.mxu0 0.0
    %954 = vmatpush1.msra.mxu0 0.0
    %955 = vmatprep.subr.mxu0 0.0
    %956 = vmatpush1.msra.mxu0 0.0
    %957 = vmatprep.subr.mxu0 0.0
    %958 = vmatpush1.msra.mxu0 0.0
    %959 = vmatprep.subr.mxu0 0.0
    %960 = vmatpush1.msra.mxu0 0.0
    %961 = vmatprep.subr.mxu0 0.0
    %962 = vmatpush1.msra.mxu0 0.0
    %963 = vmatprep.subr.mxu0 0.0
    %964 = vmatpush1.msra.mxu0 0.0
    %965 = vmatprep.subr.mxu0 0.0
    %966 = vmatpush1.msra.mxu0 0.0
    %967 = vmatprep.subr.mxu0 0.0
    %968 = vmatpush1.msra.mxu0 0.0
    %969 = vmatprep.mubr.f32.mxu0 0.0
    %970 = vmatmul.mubr.f32.gmra.mrb[0].mxu0 %v825
    %v971 = vpop.f32.mrb[0].mxu0
    %v972 = vadd.f32 %v828, %v971
    %v973 = vpop.f32.mrb[0].mxu0
    %v974 = vadd.f32 %v829, %v973
    %975 = vdwg.mxu0
    %v976 = vmul.f32 %v901, 0.5
    %v977 = vmul.f32 %v903, 0.5
    %v978 = vmul.f32 %v972, 0.5
    %v979 = vmul.f32 %v974, 0.5
    %v980 = vtanh.pop %v976
    %v981 = vtanh.pop %v977
    %v982 = vtanh.pop %v978
    %v983 = vtanh.pop %v979
    %v984 = vmul.f32 %v980, 0.5
    %v985 = vmul.f32 %v981, 0.5
    %v986 = vmul.f32 %v982, 0.5
    %v987 = vmul.f32 %v983, 0.5
    %v988 = vadd.f32 %v984, 0.5
    %v989 = vadd.f32 %v985, 0.5
    %v990 = vadd.f32 %v986, 0.5
    %v991 = vadd.f32 %v987, 0.5
    %v992 = vmul.f32 %v988, %v823
    %v993 = vmul.f32 %v990, %v989
    %v994 = vadd.f32 %v992, %v993
    %v995 = vtanh.pop %v994
    %v996 = vmul.f32 %v995, %v991
    %v997 = vrot.slane %v249, 4
    %v998 = vrot.slane %v250, 4
    %v999 = vrot.slane %v251, 4
    %v1000 = vrot.slane %v252, 4
    %1005 = vmatprep.subr.mxu0 %v254
    %1006 = vmatpush1.msra.mxu0 %v253
    %1007 = vmatprep.subr.mxu0 %v258
    %1008 = vmatpush1.msra.mxu0 %v257
    %1009 = vmatprep.subr.mxu0 %v262
    %1010 = vmatpush1.msra.mxu0 %v261
    %1011 = vmatprep.subr.mxu0 %v266
    %1012 = vmatpush1.msra.mxu0 %v265
    %1013 = vmatprep.subr.mxu0 %v270
    %1014 = vmatpush1.msra.mxu0 %v269
    %1015 = vmatprep.subr.mxu0 %v274
    %1016 = vmatpush1.msra.mxu0 %v273
    %1017 = vmatprep.subr.mxu0 %v278
    %1018 = vmatpush1.msra.mxu0 %v277
    %1019 = vmatprep.subr.mxu0 %v282
    %1020 = vmatpush1.msra.mxu0 %v281
    %1021 = vmatprep.subr.mxu0 %v286
    %1022 = vmatpush1.msra.mxu0 %v285
    %1023 = vmatprep.subr.mxu0 %v290
    %1024 = vmatpush1.msra.mxu0 %v289
    %1025 = vmatprep.subr.mxu0 %v294
    %1026 = vmatpush1.msra.mxu0 %v293
    %1027 = vmatprep.subr.mxu0 %v298
    %1028 = vmatpush1.msra.mxu0 %v297
    %1029 = vmatprep.subr.mxu0 %v302
    %1030 = vmatpush1.msra.mxu0 %v301
    %1031 = vmatprep.subr.mxu0 %v306
    %1032 = vmatpush1.msra.mxu0 %v305
    %1033 = vmatprep.subr.mxu0 %v310
    %1034 = vmatpush1.msra.mxu0 %v309
    %1035 = vmatprep.subr.mxu0 %v314
    %1036 = vmatpush1.msra.mxu0 %v313
    %1037 = vmatprep.subr.mxu0 0.0
    %1038 = vmatpush1.msra.mxu0 0.0
    %1039 = vmatprep.subr.mxu0 0.0
    %1040 = vmatpush1.msra.mxu0 0.0
    %1041 = vmatprep.subr.mxu0 0.0
    %1042 = vmatpush1.msra.mxu0 0.0
    %1043 = vmatprep.subr.mxu0 0.0
    %1044 = vmatpush1.msra.mxu0 0.0
    %1045 = vmatprep.subr.mxu0 0.0
    %1046 = vmatpush1.msra.mxu0 0.0
    %1047 = vmatprep.subr.mxu0 0.0
    %1048 = vmatpush1.msra.mxu0 0.0
    %1049 = vmatprep.subr.mxu0 0.0
    %1050 = vmatpush1.msra.mxu0 0.0
    %1051 = vmatprep.subr.mxu0 0.0
    %1052 = vmatpush1.msra.mxu0 0.0
    %1053 = vmatprep.subr.mxu0 0.0
    %1054 = vmatpush1.msra.mxu0 0.0
    %1055 = vmatprep.subr.mxu0 0.0
    %1056 = vmatpush1.msra.mxu0 0.0
    %1057 = vmatprep.subr.mxu0 0.0
    %1058 = vmatpush1.msra.mxu0 0.0
    %1059 = vmatprep.subr.mxu0 0.0
    %1060 = vmatpush1.msra.mxu0 0.0
    %1061 = vmatprep.subr.mxu0 0.0
    %1062 = vmatpush1.msra.mxu0 0.0
    %1063 = vmatprep.subr.mxu0 0.0
    %1064 = vmatpush1.msra.mxu0 0.0
    %1065 = vmatprep.subr.mxu0 0.0
    %1066 = vmatpush1.msra.mxu0 0.0
    %1067 = vmatprep.subr.mxu0 0.0
    %1068 = vmatpush1.msra.mxu0 0.0
    %1069 = vmatprep.mubr.f32.mxu0 0.0
    %1070 = vmatmul.mubr.f32.gmra.mrb[0].mxu0 %v996
    %v1071 = vpop.f32.mrb[0].mxu0
    %v1072 = vadd.f32 %v997, %v1071
    %v1073 = vpop.f32.mrb[0].mxu0
    %v1074 = vadd.f32 %v998, %v1073
    %1075 = vdwg.mxu0
    %1076 = vmatprep.subr.mxu0 %v256
    %1077 = vmatpush1.msra.mxu0 %v255
    %1078 = vmatprep.subr.mxu0 %v260
    %1079 = vmatpush1.msra.mxu0 %v259
    %1080 = vmatprep.subr.mxu0 %v264
    %1081 = vmatpush1.msra.mxu0 %v263
    %1082 = vmatprep.subr.mxu0 %v268
    %1083 = vmatpush1.msra.mxu0 %v267
    %1084 = vmatprep.subr.mxu0 %v272
    %1085 = vmatpush1.msra.mxu0 %v271
    %1086 = vmatprep.subr.mxu0 %v276
    %1087 = vmatpush1.msra.mxu0 %v275
    %1088 = vmatprep.subr.mxu0 %v280
    %1089 = vmatpush1.msra.mxu0 %v279
    %1090 = vmatprep.subr.mxu0 %v284
    %1091 = vmatpush1.msra.mxu0 %v283
    %1092 = vmatprep.subr.mxu0 %v288
    %1093 = vmatpush1.msra.mxu0 %v287
    %1094 = vmatprep.subr.mxu0 %v292
    %1095 = vmatpush1.msra.mxu0 %v291
    %1096 = vmatprep.subr.mxu0 %v296
    %1097 = vmatpush1.msra.mxu0 %v295
    %1098 = vmatprep.subr.mxu0 %v300
    %1099 = vmatpush1.msra.mxu0 %v299
    %1100 = vmatprep.subr.mxu0 %v304
    %1101 = vmatpush1.msra.mxu0 %v303
    %1102 = vmatprep.subr.mxu0 %v308
    %1103 = vmatpush1.msra.mxu0 %v307
    %1104 = vmatprep.subr.mxu0 %v312
    %1105 = vmatpush1.msra.mxu0 %v311
    %1106 = vmatprep.subr.mxu0 %v316
    %1107 = vmatpush1.msra.mxu0 %v315
    %1108 = vmatprep.subr.mxu0 0.0
    %1109 = vmatpush1.msra.mxu0 0.0
    %1110 = vmatprep.subr.mxu0 0.0
    %1111 = vmatpush1.msra.mxu0 0.0
    %1112 = vmatprep.subr.mxu0 0.0
    %1113 = vmatpush1.msra.mxu0 0.0
    %1114 = vmatprep.subr.mxu0 0.0
    %1115 = vmatpush1.msra.mxu0 0.0
    %1116 = vmatprep.subr.mxu0 0.0
    %1117 = vmatpush1.msra.mxu0 0.0
    %1118 = vmatprep.subr.mxu0 0.0
    %1119 = vmatpush1.msra.mxu0 0.0
    %1120 = vmatprep.subr.mxu0 0.0
    %1121 = vmatpush1.msra.mxu0 0.0
    %1122 = vmatprep.subr.mxu0 0.0
    %1123 = vmatpush1.msra.mxu0 0.0
    %1124 = vmatprep.subr.mxu0 0.0
    %1125 = vmatpush1.msra.mxu0 0.0
    %1126 = vmatprep.subr.mxu0 0.0
    %1127 = vmatpush1.msra.mxu0 0.0
    %1128 = vmatprep.subr.mxu0 0.0
    %1129 = vmatpush1.msra.mxu0 0.0
    %1130 = vmatprep.subr.mxu0 0.0
    %1131 = vmatpush1.msra.mxu0 0.0
    %1132 = vmatprep.subr.mxu0 0.0
    %1133 = vmatpush1.msra.mxu0 0.0
    %1134 = vmatprep.subr.mxu0 0.0
    %1135 = vmatpush1.msra.mxu0 0.0
    %1136 = vmatprep.subr.mxu0 0.0
    %1137 = vmatpush1.msra.mxu0 0.0
    %1138 = vmatprep.subr.mxu0 0.0
    %1139 = vmatpush1.msra.mxu0 0.0
    %1140 = vmatprep.mubr.f32.mxu0 0.0
    %1141 = vmatmul.mubr.f32.gmra.mrb[0].mxu0 %v996
    %v1142 = vpop.f32.mrb[0].mxu0
    %v1143 = vadd.f32 %v999, %v1142
    %v1144 = vpop.f32.mrb[0].mxu0
    %v1145 = vadd.f32 %v1000, %v1144
    %1146 = vdwg.mxu0
    %v1147 = vmul.f32 %v1072, 0.5
    %v1148 = vmul.f32 %v1074, 0.5
    %v1149 = vmul.f32 %v1143, 0.5
    %v1150 = vmul.f32 %v1145, 0.5
    %v1151 = vtanh.pop %v1147
    %v1152 = vtanh.pop %v1148
    %v1153 = vtanh.pop %v1149
    %v1154 = vtanh.pop %v1150
    %v1155 = vmul.f32 %v1151, 0.5
    %v1156 = vmul.f32 %v1152, 0.5
    %v1157 = vmul.f32 %v1153, 0.5
    %v1158 = vmul.f32 %v1154, 0.5
    %v1159 = vadd.f32 %v1155, 0.5
    %v1160 = vadd.f32 %v1156, 0.5
    %v1161 = vadd.f32 %v1157, 0.5
    %v1162 = vadd.f32 %v1158, 0.5
    %v1163 = vmul.f32 %v1159, %v994
    %v1164 = vmul.f32 %v1161, %v1160
    %v1165 = vadd.f32 %v1163, %v1164
    %v1166 = vtanh.pop %v1165
    %v1167 = vmul.f32 %v1166, %v1162
    %v1168 = vrot.slane %v249, 5
    %v1169 = vrot.slane %v250, 5
    %v1170 = vrot.slane %v251, 5
    %v1171 = vrot.slane %v252, 5
    %1176 = vmatprep.subr.mxu0 %v254
    %1177 = vmatpush1.msra.mxu0 %v253
    %1178 = vmatprep.subr.mxu0 %v258
    %1179 = vmatpush1.msra.mxu0 %v257
    %1180 = vmatprep.subr.mxu0 %v262
    %1181 = vmatpush1.msra.mxu0 %v261
    %1182 = vmatprep.subr.mxu0 %v266
    %1183 = vmatpush1.msra.mxu0 %v265
    %1184 = vmatprep.subr.mxu0 %v270
    %1185 = vmatpush1.msra.mxu0 %v269
    %1186 = vmatprep.subr.mxu0 %v274
    %1187 = vmatpush1.msra.mxu0 %v273
    %1188 = vmatprep.subr.mxu0 %v278
    %1189 = vmatpush1.msra.mxu0 %v277
    %1190 = vmatprep.subr.mxu0 %v282
    %1191 = vmatpush1.msra.mxu0 %v281
    %1192 = vmatprep.subr.mxu0 %v286
    %1193 = vmatpush1.msra.mxu0 %v285
    %1194 = vmatprep.subr.mxu0 %v290
    %1195 = vmatpush1.msra.mxu0 %v289
    %1196 = vmatprep.subr.mxu0 %v294
    %1197 = vmatpush1.msra.mxu0 %v293
    %1198 = vmatprep.subr.mxu0 %v298
    %1199 = vmatpush1.msra.mxu0 %v297
    %1200 = vmatprep.subr.mxu0 %v302
    %1201 = vmatpush1.msra.mxu0 %v301
    %1202 = vmatprep.subr.mxu0 %v306
    %1203 = vmatpush1.msra.mxu0 %v305
    %1204 = vmatprep.subr.mxu0 %v310
    %1205 = vmatpush1.msra.mxu0 %v309
    %1206 = vmatprep.subr.mxu0 %v314
    %1207 = vmatpush1.msra.mxu0 %v313
    %1208 = vmatprep.subr.mxu0 0.0
    %1209 = vmatpush1.msra.mxu0 0.0
    %1210 = vmatprep.subr.mxu0 0.0
    %1211 = vmatpush1.msra.mxu0 0.0
    %1212 = vmatprep.subr.mxu0 0.0
    %1213 = vmatpush1.msra.mxu0 0.0
    %1214 = vmatprep.subr.mxu0 0.0
    %1215 = vmatpush1.msra.mxu0 0.0
    %1216 = vmatprep.subr.mxu0 0.0
    %1217 = vmatpush1.msra.mxu0 0.0
    %1218 = vmatprep.subr.mxu0 0.0
    %1219 = vmatpush1.msra.mxu0 0.0
    %1220 = vmatprep.subr.mxu0 0.0
    %1221 = vmatpush1.msra.mxu0 0.0
    %1222 = vmatprep.subr.mxu0 0.0
    %1223 = vmatpush1.msra.mxu0 0.0
    %1224 = vmatprep.subr.mxu0 0.0
    %1225 = vmatpush1.msra.mxu0 0.0
    %1226 = vmatprep.subr.mxu0 0.0
    %1227 = vmatpush1.msra.mxu0 0.0
    %1228 = vmatprep.subr.mxu0 0.0
    %1229 = vmatpush1.msra.mxu0 0.0
    %1230 = vmatprep.subr.mxu0 0.0
    %1231 = vmatpush1.msra.mxu0 0.0
    %1232 = vmatprep.subr.mxu0 0.0
    %1233 = vmatpush1.msra.mxu0 0.0
    %1234 = vmatprep.subr.mxu0 0.0
    %1235 = vmatpush1.msra.mxu0 0.0
    %1236 = vmatprep.subr.mxu0 0.0
    %1237 = vmatpush1.msra.mxu0 0.0
    %1238 = vmatprep.subr.mxu0 0.0
    %1239 = vmatpush1.msra.mxu0 0.0
    %1240 = vmatprep.mubr.f32.mxu0 0.0
    %1241 = vmatmul.mubr.f32.gmra.mrb[0].mxu0 %v1167
    %v1242 = vpop.f32.mrb[0].mxu0
    %v1243 = vadd.f32 %v1168, %v1242
    %v1244 = vpop.f32.mrb[0].mxu0
    %v1245 = vadd.f32 %v1169, %v1244
    %1246 = vdwg.mxu0
    %1247 = vmatprep.subr.mxu0 %v256
    %1248 = vmatpush1.msra.mxu0 %v255
    %1249 = vmatprep.subr.mxu0 %v260
    %1250 = vmatpush1.msra.mxu0 %v259
    %1251 = vmatprep.subr.mxu0 %v264
    %1252 = vmatpush1.msra.mxu0 %v263
    %1253 = vmatprep.subr.mxu0 %v268
    %1254 = vmatpush1.msra.mxu0 %v267
    %1255 = vmatprep.subr.mxu0 %v272
    %1256 = vmatpush1.msra.mxu0 %v271
    %1257 = vmatprep.subr.mxu0 %v276
    %1258 = vmatpush1.msra.mxu0 %v275
    %1259 = vmatprep.subr.mxu0 %v280
    %1260 = vmatpush1.msra.mxu0 %v279
    %1261 = vmatprep.subr.mxu0 %v284
    %1262 = vmatpush1.msra.mxu0 %v283
    %1263 = vmatprep.subr.mxu0 %v288
    %1264 = vmatpush1.msra.mxu0 %v287
    %1265 = vmatprep.subr.mxu0 %v292
    %1266 = vmatpush1.msra.mxu0 %v291
    %1267 = vmatprep.subr.mxu0 %v296
    %1268 = vmatpush1.msra.mxu0 %v295
    %1269 = vmatprep.subr.mxu0 %v300
    %1270 = vmatpush1.msra.mxu0 %v299
    %1271 = vmatprep.subr.mxu0 %v304
    %1272 = vmatpush1.msra.mxu0 %v303
    %1273 = vmatprep.subr.mxu0 %v308
    %1274 = vmatpush1.msra.mxu0 %v307
    %1275 = vmatprep.subr.mxu0 %v312
    %1276 = vmatpush1.msra.mxu0 %v311
    %1277 = vmatprep.subr.mxu0 %v316
    %1278 = vmatpush1.msra.mxu0 %v315
    %1279 = vmatprep.subr.mxu0 0.0
    %1280 = vmatpush1.msra.mxu0 0.0
    %1281 = vmatprep.subr.mxu0 0.0
    %1282 = vmatpush1.msra.mxu0 0.0
    %1283 = vmatprep.subr.mxu0 0.0
    %1284 = vmatpush1.msra.mxu0 0.0
    %1285 = vmatprep.subr.mxu0 0.0
    %1286 = vmatpush1.msra.mxu0 0.0
    %1287 = vmatprep.subr.mxu0 0.0
    %1288 = vmatpush1.msra.mxu0 0.0
    %1289 = vmatprep.subr.mxu0 0.0
    %1290 = vmatpush1.msra.mxu0 0.0
    %1291 = vmatprep.subr.mxu0 0.0
    %1292 = vmatpush1.msra.mxu0 0.0
    %1293 = vmatprep.subr.mxu0 0.0
    %1294 = vmatpush1.msra.mxu0 0.0
    %1295 = vmatprep.subr.mxu0 0.0
    %1296 = vmatpush1.msra.mxu0 0.0
    %1297 = vmatprep.subr.mxu0 0.0
    %1298 = vmatpush1.msra.mxu0 0.0
    %1299 = vmatprep.subr.mxu0 0.0
    %1300 = vmatpush1.msra.mxu0 0.0
    %1301 = vmatprep.subr.mxu0 0.0
    %1302 = vmatpush1.msra.mxu0 0.0
    %1303 = vmatprep.subr.mxu0 0.0
    %1304 = vmatpush1.msra.mxu0 0.0
    %1305 = vmatprep.subr.mxu0 0.0
    %1306 = vmatpush1.msra.mxu0 0.0
    %1307 = vmatprep.subr.mxu0 0.0
    %1308 = vmatpush1.msra.mxu0 0.0
    %1309 = vmatprep.subr.mxu0 0.0
    %1310 = vmatpush1.msra.mxu0 0.0
    %1311 = vmatprep.mubr.f32.mxu0 0.0
    %1312 = vmatmul.mubr.f32.gmra.mrb[0].mxu0 %v1167
    %v1313 = vpop.f32.mrb[0].mxu0
    %v1314 = vadd.f32 %v1170, %v1313
    %v1315 = vpop.f32.mrb[0].mxu0
    %v1316 = vadd.f32 %v1171, %v1315
    %1317 = vdwg.mxu0
    %v1318 = vmul.f32 %v1243, 0.5
    %v1319 = vmul.f32 %v1245, 0.5
    %v1320 = vmul.f32 %v1314, 0.5
    %v1321 = vmul.f32 %v1316, 0.5
    %v1322 = vtanh.pop %v1318
    %v1323 = vtanh.pop %v1319
    %v1324 = vtanh.pop %v1320
    %v1325 = vtanh.pop %v1321
    %v1326 = vmul.f32 %v1322, 0.5
    %v1327 = vmul.f32 %v1323, 0.5
    %v1328 = vmul.f32 %v1324, 0.5
    %v1329 = vmul.f32 %v1325, 0.5
    %v1330 = vadd.f32 %v1326, 0.5
    %v1331 = vadd.f32 %v1327, 0.5
    %v1332 = vadd.f32 %v1328, 0.5
    %v1333 = vadd.f32 %v1329, 0.5
    %v1334 = vmul.f32 %v1330, %v1165
    %v1335 = vmul.f32 %v1332, %v1331
    %v1336 = vadd.f32 %v1334, %v1335
    %v1337 = vtanh.pop %v1336
    %v1338 = vmul.f32 %v1337, %v1333
    %v1339 = vrot.slane %v249, 6
    %v1340 = vrot.slane %v250, 6
    %v1341 = vrot.slane %v251, 6
    %v1342 = vrot.slane %v252, 6
    %1347 = vmatprep.subr.mxu0 %v254
    %1348 = vmatpush1.msra.mxu0 %v253
    %1349 = vmatprep.subr.mxu0 %v258
    %1350 = vmatpush1.msra.mxu0 %v257
    %1351 = vmatprep.subr.mxu0 %v262
    %1352 = vmatpush1.msra.mxu0 %v261
    %1353 = vmatprep.subr.mxu0 %v266
    %1354 = vmatpush1.msra.mxu0 %v265
    %1355 = vmatprep.subr.mxu0 %v270
    %1356 = vmatpush1.msra.mxu0 %v269
    %1357 = vmatprep.subr.mxu0 %v274
    %1358 = vmatpush1.msra.mxu0 %v273
    %1359 = vmatprep.subr.mxu0 %v278
    %1360 = vmatpush1.msra.mxu0 %v277
    %1361 = vmatprep.subr.mxu0 %v282
    %1362 = vmatpush1.msra.mxu0 %v281
    %1363 = vmatprep.subr.mxu0 %v286
    %1364 = vmatpush1.msra.mxu0 %v285
    %1365 = vmatprep.subr.mxu0 %v290
    %1366 = vmatpush1.msra.mxu0 %v289
    %1367 = vmatprep.subr.mxu0 %v294
    %1368 = vmatpush1.msra.mxu0 %v293
    %1369 = vmatprep.subr.mxu0 %v298
    %1370 = vmatpush1.msra.mxu0 %v297
    %1371 = vmatprep.subr.mxu0 %v302
    %1372 = vmatpush1.msra.mxu0 %v301
    %1373 = vmatprep.subr.mxu0 %v306
    %1374 = vmatpush1.msra.mxu0 %v305
    %1375 = vmatprep.subr.mxu0 %v310
    %1376 = vmatpush1.msra.mxu0 %v309
    %1377 = vmatprep.subr.mxu0 %v314
    %1378 = vmatpush1.msra.mxu0 %v313
    %1379 = vmatprep.subr.mxu0 0.0
    %1380 = vmatpush1.msra.mxu0 0.0
    %1381 = vmatprep.subr.mxu0 0.0
    %1382 = vmatpush1.msra.mxu0 0.0
    %1383 = vmatprep.subr.mxu0 0.0
    %1384 = vmatpush1.msra.mxu0 0.0
    %1385 = vmatprep.subr.mxu0 0.0
    %1386 = vmatpush1.msra.mxu0 0.0
    %1387 = vmatprep.subr.mxu0 0.0
    %1388 = vmatpush1.msra.mxu0 0.0
    %1389 = vmatprep.subr.mxu0 0.0
    %1390 = vmatpush1.msra.mxu0 0.0
    %1391 = vmatprep.subr.mxu0 0.0
    %1392 = vmatpush1.msra.mxu0 0.0
    %1393 = vmatprep.subr.mxu0 0.0
    %1394 = vmatpush1.msra.mxu0 0.0
    %1395 = vmatprep.subr.mxu0 0.0
    %1396 = vmatpush1.msra.mxu0 0.0
    %1397 = vmatprep.subr.mxu0 0.0
    %1398 = vmatpush1.msra.mxu0 0.0
    %1399 = vmatprep.subr.mxu0 0.0
    %1400 = vmatpush1.msra.mxu0 0.0
    %1401 = vmatprep.subr.mxu0 0.0
    %1402 = vmatpush1.msra.mxu0 0.0
    %1403 = vmatprep.subr.mxu0 0.0
    %1404 = vmatpush1.msra.mxu0 0.0
    %1405 = vmatprep.subr.mxu0 0.0
    %1406 = vmatpush1.msra.mxu0 0.0
    %1407 = vmatprep.subr.mxu0 0.0
    %1408 = vmatpush1.msra.mxu0 0.0
    %1409 = vmatprep.subr.mxu0 0.0
    %1410 = vmatpush1.msra.mxu0 0.0
    %1411 = vmatprep.mubr.f32.mxu0 0.0
    %1412 = vmatmul.mubr.f32.gmra.mrb[0].mxu0 %v1338
    %v1413 = vpop.f32.mrb[0].mxu0
    %v1414 = vadd.f32 %v1339, %v1413
    %v1415 = vpop.f32.mrb[0].mxu0
    %v1416 = vadd.f32 %v1340, %v1415
    %1417 = vdwg.mxu0
    %1418 = vmatprep.subr.mxu0 %v256
    %1419 = vmatpush1.msra.mxu0 %v255
    %1420 = vmatprep.subr.mxu0 %v260
    %1421 = vmatpush1.msra.mxu0 %v259
    %1422 = vmatprep.subr.mxu0 %v264
    %1423 = vmatpush1.msra.mxu0 %v263
    %1424 = vmatprep.subr.mxu0 %v268
    %1425 = vmatpush1.msra.mxu0 %v267
    %1426 = vmatprep.subr.mxu0 %v272
    %1427 = vmatpush1.msra.mxu0 %v271
    %1428 = vmatprep.subr.mxu0 %v276
    %1429 = vmatpush1.msra.mxu0 %v275
    %1430 = vmatprep.subr.mxu0 %v280
    %1431 = vmatpush1.msra.mxu0 %v279
    %1432 = vmatprep.subr.mxu0 %v284
    %1433 = vmatpush1.msra.mxu0 %v283
    %1434 = vmatprep.subr.mxu0 %v288
    %1435 = vmatpush1.msra.mxu0 %v287
    %1436 = vmatprep.subr.mxu0 %v292
    %1437 = vmatpush1.msra.mxu0 %v291
    %1438 = vmatprep.subr.mxu0 %v296
    %1439 = vmatpush1.msra.mxu0 %v295
    %1440 = vmatprep.subr.mxu0 %v300
    %1441 = vmatpush1.msra.mxu0 %v299
    %1442 = vmatprep.subr.mxu0 %v304
    %1443 = vmatpush1.msra.mxu0 %v303
    %1444 = vmatprep.subr.mxu0 %v308
    %1445 = vmatpush1.msra.mxu0 %v307
    %1446 = vmatprep.subr.mxu0 %v312
    %1447 = vmatpush1.msra.mxu0 %v311
    %1448 = vmatprep.subr.mxu0 %v316
    %1449 = vmatpush1.msra.mxu0 %v315
    %1450 = vmatprep.subr.mxu0 0.0
    %1451 = vmatpush1.msra.mxu0 0.0
    %1452 = vmatprep.subr.mxu0 0.0
    %1453 = vmatpush1.msra.mxu0 0.0
    %1454 = vmatprep.subr.mxu0 0.0
    %1455 = vmatpush1.msra.mxu0 0.0
    %1456 = vmatprep.subr.mxu0 0.0
    %1457 = vmatpush1.msra.mxu0 0.0
    %1458 = vmatprep.subr.mxu0 0.0
    %1459 = vmatpush1.msra.mxu0 0.0
    %1460 = vmatprep.subr.mxu0 0.0
    %1461 = vmatpush1.msra.mxu0 0.0
    %1462 = vmatprep.subr.mxu0 0.0
    %1463 = vmatpush1.msra.mxu0 0.0
    %1464 = vmatprep.subr.mxu0 0.0
    %1465 = vmatpush1.msra.mxu0 0.0
    %1466 = vmatprep.subr.mxu0 0.0
    %1467 = vmatpush1.msra.mxu0 0.0
    %1468 = vmatprep.subr.mxu0 0.0
    %1469 = vmatpush1.msra.mxu0 0.0
    %1470 = vmatprep.subr.mxu0 0.0
    %1471 = vmatpush1.msra.mxu0 0.0
    %1472 = vmatprep.subr.mxu0 0.0
    %1473 = vmatpush1.msra.mxu0 0.0
    %1474 = vmatprep.subr.mxu0 0.0
    %1475 = vmatpush1.msra.mxu0 0.0
    %1476 = vmatprep.subr.mxu0 0.0
    %1477 = vmatpush1.msra.mxu0 0.0
    %1478 = vmatprep.subr.mxu0 0.0
    %1479 = vmatpush1.msra.mxu0 0.0
    %1480 = vmatprep.subr.mxu0 0.0
    %1481 = vmatpush1.msra.mxu0 0.0
    %1482 = vmatprep.mubr.f32.mxu0 0.0
    %1483 = vmatmul.mubr.f32.gmra.mrb[0].mxu0 %v1338
    %v1484 = vpop.f32.mrb[0].mxu0
    %v1485 = vadd.f32 %v1341, %v1484
    %v1486 = vpop.f32.mrb[0].mxu0
    %v1487 = vadd.f32 %v1342, %v1486
    %1488 = vdwg.mxu0
    %v1489 = vmul.f32 %v1414, 0.5
    %v1490 = vmul.f32 %v1416, 0.5
    %v1491 = vmul.f32 %v1485, 0.5
    %v1492 = vmul.f32 %v1487, 0.5
    %v1493 = vtanh.pop %v1489
    %v1494 = vtanh.pop %v1490
    %v1495 = vtanh.pop %v1491
    %v1496 = vtanh.pop %v1492
    %v1497 = vmul.f32 %v1493, 0.5
    %v1498 = vmul.f32 %v1494, 0.5
    %v1499 = vmul.f32 %v1495, 0.5
    %v1500 = vmul.f32 %v1496, 0.5
    %v1501 = vadd.f32 %v1497, 0.5
    %v1502 = vadd.f32 %v1498, 0.5
    %v1503 = vadd.f32 %v1499, 0.5
    %v1504 = vadd.f32 %v1500, 0.5
    %v1505 = vmul.f32 %v1501, %v1336
    %v1506 = vmul.f32 %v1503, %v1502
    %v1507 = vadd.f32 %v1505, %v1506
    %v1508 = vtanh.pop %v1507
    %v1509 = vmul.f32 %v1508, %v1504
    %v1510 = vrot.slane %v249, 7
    %v1511 = vrot.slane %v250, 7
    %v1512 = vrot.slane %v251, 7
    %v1513 = vrot.slane %v252, 7
    %1518 = vmatprep.subr.mxu0 %v254
    %1519 = vmatpush1.msra.mxu0 %v253
    %1520 = vmatprep.subr.mxu0 %v258
    %1521 = vmatpush1.msra.mxu0 %v257
    %1522 = vmatprep.subr.mxu0 %v262
    %1523 = vmatpush1.msra.mxu0 %v261
    %1524 = vmatprep.subr.mxu0 %v266
    %1525 = vmatpush1.msra.mxu0 %v265
    %1526 = vmatprep.subr.mxu0 %v270
    %1527 = vmatpush1.msra.mxu0 %v269
    %1528 = vmatprep.subr.mxu0 %v274
    %1529 = vmatpush1.msra.mxu0 %v273
    %1530 = vmatprep.subr.mxu0 %v278
    %1531 = vmatpush1.msra.mxu0 %v277
    %1532 = vmatprep.subr.mxu0 %v282
    %1533 = vmatpush1.msra.mxu0 %v281
    %1534 = vmatprep.subr.mxu0 %v286
    %1535 = vmatpush1.msra.mxu0 %v285
    %1536 = vmatprep.subr.mxu0 %v290
    %1537 = vmatpush1.msra.mxu0 %v289
    %1538 = vmatprep.subr.mxu0 %v294
    %1539 = vmatpush1.msra.mxu0 %v293
    %1540 = vmatprep.subr.mxu0 %v298
    %1541 = vmatpush1.msra.mxu0 %v297
    %1542 = vmatprep.subr.mxu0 %v302
    %1543 = vmatpush1.msra.mxu0 %v301
    %1544 = vmatprep.subr.mxu0 %v306
    %1545 = vmatpush1.msra.mxu0 %v305
    %1546 = vmatprep.subr.mxu0 %v310
    %1547 = vmatpush1.msra.mxu0 %v309
    %1548 = vmatprep.subr.mxu0 %v314
    %1549 = vmatpush1.msra.mxu0 %v313
    %1550 = vmatprep.subr.mxu0 0.0
    %1551 = vmatpush1.msra.mxu0 0.0
    %1552 = vmatprep.subr.mxu0 0.0
    %1553 = vmatpush1.msra.mxu0 0.0
    %1554 = vmatprep.subr.mxu0 0.0
    %1555 = vmatpush1.msra.mxu0 0.0
    %1556 = vmatprep.subr.mxu0 0.0
    %1557 = vmatpush1.msra.mxu0 0.0
    %1558 = vmatprep.subr.mxu0 0.0
    %1559 = vmatpush1.msra.mxu0 0.0
    %1560 = vmatprep.subr.mxu0 0.0
    %1561 = vmatpush1.msra.mxu0 0.0
    %1562 = vmatprep.subr.mxu0 0.0
    %1563 = vmatpush1.msra.mxu0 0.0
    %1564 = vmatprep.subr.mxu0 0.0
    %1565 = vmatpush1.msra.mxu0 0.0
    %1566 = vmatprep.subr.mxu0 0.0
    %1567 = vmatpush1.msra.mxu0 0.0
    %1568 = vmatprep.subr.mxu0 0.0
    %1569 = vmatpush1.msra.mxu0 0.0
    %1570 = vmatprep.subr.mxu0 0.0
    %1571 = vmatpush1.msra.mxu0 0.0
    %1572 = vmatprep.subr.mxu0 0.0
    %1573 = vmatpush1.msra.mxu0 0.0
    %1574 = vmatprep.subr.mxu0 0.0
    %1575 = vmatpush1.msra.mxu0 0.0
    %1576 = vmatprep.subr.mxu0 0.0
    %1577 = vmatpush1.msra.mxu0 0.0
    %1578 = vmatprep.subr.mxu0 0.0
    %1579 = vmatpush1.msra.mxu0 0.0
    %1580 = vmatprep.subr.mxu0 0.0
    %1581 = vmatpush1.msra.mxu0 0.0
    %1582 = vmatprep.mubr.f32.mxu0 0.0
    %1583 = vmatmul.mubr.f32.gmra.mrb[0].mxu0 %v1509
    %v1584 = vpop.f32.mrb[0].mxu0
    %v1585 = vadd.f32 %v1510, %v1584
    %v1586 = vpop.f32.mrb[0].mxu0
    %v1587 = vadd.f32 %v1511, %v1586
    %1588 = vdwg.mxu0
    %1589 = vmatprep.subr.mxu0 %v256
    %1590 = vmatpush1.msra.mxu0 %v255
    %1591 = vmatprep.subr.mxu0 %v260
    %1592 = vmatpush1.msra.mxu0 %v259
    %1593 = vmatprep.subr.mxu0 %v264
    %1594 = vmatpush1.msra.mxu0 %v263
    %1595 = vmatprep.subr.mxu0 %v268
    %1596 = vmatpush1.msra.mxu0 %v267
    %1597 = vmatprep.subr.mxu0 %v272
    %1598 = vmatpush1.msra.mxu0 %v271
    %1599 = vmatprep.subr.mxu0 %v276
    %1600 = vmatpush1.msra.mxu0 %v275
    %1601 = vmatprep.subr.mxu0 %v280
    %1602 = vmatpush1.msra.mxu0 %v279
    %1603 = vmatprep.subr.mxu0 %v284
    %1604 = vmatpush1.msra.mxu0 %v283
    %1605 = vmatprep.subr.mxu0 %v288
    %1606 = vmatpush1.msra.mxu0 %v287
    %1607 = vmatprep.subr.mxu0 %v292
    %1608 = vmatpush1.msra.mxu0 %v291
    %1609 = vmatprep.subr.mxu0 %v296
    %1610 = vmatpush1.msra.mxu0 %v295
    %1611 = vmatprep.subr.mxu0 %v300
    %1612 = vmatpush1.msra.mxu0 %v299
    %1613 = vmatprep.subr.mxu0 %v304
    %1614 = vmatpush1.msra.mxu0 %v303
    %1615 = vmatprep.subr.mxu0 %v308
    %1616 = vmatpush1.msra.mxu0 %v307
    %1617 = vmatprep.subr.mxu0 %v312
    %1618 = vmatpush1.msra.mxu0 %v311
    %1619 = vmatprep.subr.mxu0 %v316
    %1620 = vmatpush1.msra.mxu0 %v315
    %1621 = vmatprep.subr.mxu0 0.0
    %1622 = vmatpush1.msra.mxu0 0.0
    %1623 = vmatprep.subr.mxu0 0.0
    %1624 = vmatpush1.msra.mxu0 0.0
    %1625 = vmatprep.subr.mxu0 0.0
    %1626 = vmatpush1.msra.mxu0 0.0
    %1627 = vmatprep.subr.mxu0 0.0
    %1628 = vmatpush1.msra.mxu0 0.0
    %1629 = vmatprep.subr.mxu0 0.0
    %1630 = vmatpush1.msra.mxu0 0.0
    %1631 = vmatprep.subr.mxu0 0.0
    %1632 = vmatpush1.msra.mxu0 0.0
    %1633 = vmatprep.subr.mxu0 0.0
    %1634 = vmatpush1.msra.mxu0 0.0
    %1635 = vmatprep.subr.mxu0 0.0
    %1636 = vmatpush1.msra.mxu0 0.0
    %1637 = vmatprep.subr.mxu0 0.0
    %1638 = vmatpush1.msra.mxu0 0.0
    %1639 = vmatprep.subr.mxu0 0.0
    %1640 = vmatpush1.msra.mxu0 0.0
    %1641 = vmatprep.subr.mxu0 0.0
    %1642 = vmatpush1.msra.mxu0 0.0
    %1643 = vmatprep.subr.mxu0 0.0
    %1644 = vmatpush1.msra.mxu0 0.0
    %1645 = vmatprep.subr.mxu0 0.0
    %1646 = vmatpush1.msra.mxu0 0.0
    %1647 = vmatprep.subr.mxu0 0.0
    %1648 = vmatpush1.msra.mxu0 0.0
    %1649 = vmatprep.subr.mxu0 0.0
    %1650 = vmatpush1.msra.mxu0 0.0
    %1651 = vmatprep.subr.mxu0 0.0
    %1652 = vmatpush1.msra.mxu0 0.0
    %1653 = vmatprep.mubr.f32.mxu0 0.0
    %1654 = vmatmul.mubr.f32.gmra.mrb[0].mxu0 %v1509
    %v1655 = vpop.f32.mrb[0].mxu0
    %v1656 = vadd.f32 %v1512, %v1655
    %v1657 = vpop.f32.mrb[0].mxu0
    %v1658 = vadd.f32 %v1513, %v1657
    %1659 = vdwg.mxu0
    %v1660 = vmul.f32 %v1585, 0.5
    %v1661 = vmul.f32 %v1587, 0.5
    %v1662 = vmul.f32 %v1656, 0.5
    %v1663 = vmul.f32 %v1658, 0.5
    %v1664 = vtanh.pop %v1660
    %v1665 = vtanh.pop %v1661
    %v1666 = vtanh.pop %v1662
    %v1667 = vtanh.pop %v1663
    %v1668 = vmul.f32 %v1664, 0.5
    %v1669 = vmul.f32 %v1665, 0.5
    %v1670 = vmul.f32 %v1666, 0.5
    %v1671 = vmul.f32 %v1667, 0.5
    %v1672 = vadd.f32 %v1668, 0.5
    %v1673 = vadd.f32 %v1669, 0.5
    %v1674 = vadd.f32 %v1670, 0.5
    %v1675 = vadd.f32 %v1671, 0.5
    %v1676 = vmul.f32 %v1672, %v1507
    %v1677 = vmul.f32 %v1674, %v1673
    %v1678 = vadd.f32 %v1676, %v1677
    %v1679 = vtanh.pop %v1678
    %v1680 = vmul.f32 %v1679, %v1675
    %v1682 = vrot.slane %v654, 7
    %v1685 = vrot.slane %v825, 6
    %v1688 = vrot.slane %v996, 5
    %v1691 = vrot.slane %v1167, 4
    %v1694 = vrot.slane %v1338, 3
    %v1697 = vrot.slane %v1509, 2
    %v1700 = vrot.slane %v1680, 1
    %vm1702 = vcmask 1040384
    %v1703 = vsel %vm1702, %v479, %v1682
    %vm1704 = vcmask 1041408
    %v1705 = vsel %vm1704, %v1703, %v1685
    %vm1706 = vcmask 1042432
    %v1707 = vsel %vm1706, %v1705, %v1688
    %vm1708 = vcmask 1043456
    %v1709 = vsel %vm1708, %v1707, %v1691
    %vm1710 = vcmask 1044480
    %v1711 = vsel %vm1710, %v1709, %v1694
    %vm1712 = vcmask 1045504
    %v1713 = vsel %vm1712, %v1711, %v1697
    %vm1714 = vcmask 1046528
    %v1715 = vsel %vm1714, %v1713, %v1700
    %1716 = vst [vmem:[#allocation11] sm:$0xff] %v1715
    %1717 = vst [vmem:[#allocation2] sm:$0x1] %v1680
    %1718 = vst [vmem:[#allocation3] sm:$0x1] %v1678
    // Predicated region
    $region34: #{tpu_custom_call.1} parent=1 // pred_check
      _
    $region35: #{tpu_custom_call.1} parent=1 // pred_check_branch
      %1720 = sbr.rel (0) target = $region37
    $region36: #{tpu_custom_call.1} parent=1 // pred_region
      %s1722 = ssub.s32 128, 128
      %1723 = vsyncadd [#allocation7], %s1722
      %s1725 = sshll.u32 [#allocation11], 4
      %s1726 = int_to_ptr.vmem [resolvable:$true] %s1725
      %1728 = dma.vmem_to_hbm [thread:$0]  %s1726, 128, %s4, [#allocation7]
    $region37: #{tpu_custom_call.1} parent=1 // pred_fallthru
      _
    // Predicated region
    $region38: #{tpu_custom_call.1} parent=1 // pred_check
      _
    $region39: #{tpu_custom_call.1} parent=1 // pred_check_branch
      %1730 = sbr.rel (0) target = $region41
    $region40: #{tpu_custom_call.1} parent=1 // pred_region
      %1731 = dma.done [#allocation7], 128
    $region41: #{tpu_custom_call.1} parent=1 // pred_fallthru
      _
    %1732 = vsyncpa [#allocation6], 1
    %1733 = vsyncpa [#allocation9], 1
    %1734 = vsyncpa [#allocation7], 1

</llo_original>
